<compile_context>
chip_gen: v6e
topology: v6e:2x2x1
jax: 0.10.0
libtpu: 0.0.40
codegen_flags: <defaults>
</compile_context>

<pallas_src>
import functools
import math

import jax
import jax.numpy as jnp
from jax import lax
from jax.experimental import pallas as pl
from jax.experimental.pallas import tpu as pltpu


def _layernorm(x, gamma, beta, eps=1e-5):
    mean = jnp.mean(x, axis=-1, keepdims=True)
    var = jnp.mean(jnp.square(x - mean), axis=-1, keepdims=True)
    return (x - mean) * lax.rsqrt(var + eps) * gamma + beta


def _gelu_exact(x):
    # PyTorch nn.GELU() default = exact erf-based GELU
    return 0.5 * x * (1.0 + lax.erf(x * (1.0 / math.sqrt(2.0))))


def _encoder_kernel(x_ref, kpad_ref,
                    wq_ref, bq_ref, wkv_ref, bkv_ref, wo_ref, bo_ref,
                    g1_ref, be1_ref, w1_ref, b1_ref, w2_ref, b2_ref,
                    g2_ref, be2_ref,
                    out_ref, vals_ref,
                    *, num_heads, window_size, S, D, TQ, KW, PAD):
    f32 = jnp.float32
    bf16 = jnp.bfloat16
    hd = D // num_heads
    NEG = jnp.float32(-9e15)

    qi = pl.program_id(1)
    q_start = qi * TQ
    kv_start = jnp.minimum(jnp.maximum(q_start - PAD, 0), S - KW)
    q_start = pl.multiple_of(q_start, 8)
    kv_start = pl.multiple_of(kv_start, 8)

    # Only the query tile and its key/value band are read: no (S, S) scores.
    x_q = x_ref[0, pl.ds(q_start, TQ), :]          # (TQ, D)  f32
    x_b = x_ref[0, pl.ds(kv_start, KW), :]         # (KW, D)  f32

    # QKV projections: bf16 operands on the MXU, f32 accumulation.
    q = jnp.dot(x_q.astype(bf16), wq_ref[...],
                preferred_element_type=f32) + bq_ref[...]          # (TQ, D)
    kv = jnp.dot(x_b.astype(bf16), wkv_ref[...],
                 preferred_element_type=f32) + bkv_ref[...]        # (KW, 2D)

    # Fold 1/sqrt(head_dim) into q once (O(TQ*D) instead of O(TQ*KW) per head).
    q_s = (q * (1.0 / math.sqrt(hd))).astype(bf16)                 # (TQ, D)
    k_b = kv[:, :D].astype(bf16)                                   # (KW, D)
    v_b = kv[:, D:].astype(bf16)                                   # (KW, D)

    # One combined additive bias (sliding-window band + key padding), built
    # once per grid step from scalar tile offsets; shared by all heads.
    q_pos = q_start + lax.broadcasted_iota(jnp.int32, (TQ, KW), 0)
    k_pos = kv_start + lax.broadcasted_iota(jnp.int32, (TQ, KW), 1)
    band = jnp.abs(q_pos - k_pos) <= (window_size // 2)
    bias = jnp.where(band, 0.0, NEG) + kpad_ref[0, 0]              # (TQ, KW)

    for h in range(num_heads):                  # unrolled; heads are few
        sl = slice(h * hd, (h + 1) * hd)
        s = lax.dot_general(q_s[:, sl], k_b[:, sl], (((1,), (1,)), ((), ())),
                            preferred_element_type=f32)            # (TQ, KW)
        s = s + bias
        m = jnp.max(s, axis=-1, keepdims=True)
        e = jnp.exp(s - m)
        denom = jnp.sum(e, axis=-1, keepdims=True)
        p = (e / denom).astype(bf16)            # exact softmax (no approx rcp)
        # write each head's output straight into the scratch slice (no concat)
        vals_ref[:, sl] = jnp.dot(p, v_b[:, sl], preferred_element_type=f32)

    # ---- output projection + residual + LayerNorm 1 -------------------------
    attn_out = jnp.dot(vals_ref[...].astype(bf16), wo_ref[...],
                       preferred_element_type=f32) + bo_ref[...]
    n1 = _layernorm(x_q + attn_out, g1_ref[...], be1_ref[...])

    # ---- position-wise feed-forward + residual + LayerNorm 2 -----------------
    # Exact erf GELU (PyTorch default); f32 elementwise.
    h1 = jnp.dot(n1.astype(bf16), w1_ref[...],
                 preferred_element_type=f32) + b1_ref[...]
    h1 = _gelu_exact(h1)
    ff = jnp.dot(h1.astype(bf16), w2_ref[...],
                 preferred_element_type=f32) + b2_ref[...]
    out_ref[0] = _layernorm(n1 + ff, g2_ref[...], be2_ref[...])


def encoder_layer(x, padding_mask, params, *, num_heads, window_size, tq=128):
    B, S, D = x.shape
    HID = params["w1"].shape[1]
    assert window_size % 2 == 0, "window size must be an even number"
    assert D % num_heads == 0
    assert D % 128 == 0, "keep embed dim lane-dense (multiple of 128)"
    TQ = min(tq, S)
    assert TQ % 8 == 0 and S % TQ == 0
    NQ = S // TQ
    PAD = ((window_size // 2 + 7) // 8) * 8     # sublane-aligned halo >= w/2
    KW = min(TQ + 2 * PAD, S)                   # key/value band width per tile
    assert KW % 8 == 0

    # Per-(batch, query-tile) additive key-padding bias, gathered in plain JAX
    # so the kernel never dynamically slices the mask along the lane dim.
    q_starts = jnp.arange(NQ, dtype=jnp.int32) * TQ
    kv_starts = jnp.clip(q_starts - PAD, 0, S - KW)                 # (NQ,)
    gather = kv_starts[:, None] + jnp.arange(KW, dtype=jnp.int32)[None, :]
    key_ok = padding_mask[:, gather] != 0                           # (B, NQ, KW)
    pad_bias = jnp.where(key_ok, 0.0, -9e15).astype(jnp.float32)[:, :, None, :]

    bf16 = jnp.bfloat16
    kernel = functools.partial(_encoder_kernel, num_heads=num_heads,
                               window_size=window_size,
                               S=S, D=D, TQ=TQ, KW=KW, PAD=PAD)

    w2d = lambda shape: pl.BlockSpec(shape, lambda b, qi: (0, 0))

    return pl.pallas_call(
        kernel,
        out_shape=jax.ShapeDtypeStruct((B, S, D), jnp.float32),
        grid=(B, NQ),
        in_specs=[
            pl.BlockSpec((1, S, D), lambda b, qi: (b, 0, 0)),          # x
            pl.BlockSpec((1, 1, 1, KW), lambda b, qi: (b, qi, 0, 0)),  # key-pad bias
            w2d((D, D)), w2d((1, D)),               # Wq, bq
            w2d((D, 2 * D)), w2d((1, 2 * D)),       # [Wk|Wv], b_kv
            w2d((D, D)), w2d((1, D)),               # Wo, bo
            w2d((1, D)), w2d((1, D)),               # norm1 gamma/beta
            w2d((D, HID)), w2d((1, HID)),           # fc1
            w2d((HID, D)), w2d((1, D)),             # fc2
            w2d((1, D)), w2d((1, D)),               # norm2 gamma/beta
        ],
        out_specs=pl.BlockSpec((1, TQ, D), lambda b, qi: (b, qi, 0)),
        scratch_shapes=[pltpu.VMEM((TQ, D), jnp.float32)],
        compiler_params=pltpu.CompilerParams(
            dimension_semantics=("parallel", "parallel"),
            vmem_limit_bytes=32 * 1024 * 1024),
    )(x, pad_bias,
      params["wq"].astype(bf16), params["bq"],
      params["wkv"].astype(bf16), params["bkv"],
      params["wo"].astype(bf16), params["bo"],
      params["g1"], params["be1"],
      params["w1"].astype(bf16), params["b1"],
      params["w2"].astype(bf16), params["b2"],
      params["g2"], params["be2"])


# ---------------- pure-JAX reference (same math, no Pallas) ------------------
# mixed=True mirrors the kernel's bf16-operand / f32-accumulation matmuls (same
# cast points) for a tight check; mixed=False is the faithful all-f32 PyTorch
# math used as a loose logic-bug check.
def reference(x, padding_mask, params, *, num_heads, window_size, mixed=True):
    B, S, D = x.shape
    hd = D // num_heads
    f32 = jnp.float32
    cast = (lambda a: a.astype(jnp.bfloat16)) if mixed else (lambda a: a)
    mm = lambda a, b: jnp.dot(cast(a), cast(b), preferred_element_type=f32)

    q = mm(x, params["wq"]) + params["bq"]
    kv = mm(x, params["wkv"]) + params["bkv"]
    k, v = kv[..., :D], kv[..., D:]

    heads = lambda t: t.reshape(B, S, num_heads, hd).transpose(0, 2, 1, 3)
    qh = heads(q * (1.0 / math.sqrt(hd)))
    kh, vh = heads(k), heads(v)

    scores = jnp.einsum("bhqd,bhkd->bhqk", cast(qh), cast(kh),
                        preferred_element_type=f32)
    i = jnp.arange(S)
    band = jnp.abs(i[:, None] - i[None, :]) <= window_size // 2
    keymask = (padding_mask != 0)[:, None, None, :]
    scores = jnp.where(band[None, None], scores, -9e15)
    scores = jnp.where(keymask, scores, -9e15)
    attn = jax.nn.softmax(scores, axis=-1)
    vals = jnp.einsum("bhqk,bhkd->bhqd", cast(attn), cast(vh),
                      preferred_element_type=f32)
    vals = vals.transpose(0, 2, 1, 3).reshape(B, S, D)
    o = mm(vals, params["wo"]) + params["bo"]

    def ln(z, g, b, eps=1e-5):
        m = jnp.mean(z, -1, keepdims=True)
        var = jnp.mean((z - m) ** 2, -1, keepdims=True)
        return (z - m) / jnp.sqrt(var + eps) * g + b

    n1 = ln(x + o, params["g1"], params["be1"])
    h1 = jax.nn.gelu(mm(n1, params["w1"]) + params["b1"], approximate=False)
    ff = mm(h1, params["w2"]) + params["b2"]
    return ln(n1 + ff, params["g2"], params["be2"])


def init_params(key, D, HID):
    ks = jax.random.split(key, 8)
    f32 = jnp.float32
    return {
        "wq":  0.1 * jax.random.normal(ks[0], (D, D), f32),
        "bq":  jnp.zeros((1, D), f32),
        "wkv": 0.1 * jax.random.normal(ks[1], (D, 2 * D), f32),   # [Wk | Wv]
        "bkv": jnp.zeros((1, 2 * D), f32),
        "wo":  0.1 * jax.random.normal(ks[2], (D, D), f32),
        "bo":  jnp.zeros((1, D), f32),
        "g1":  jnp.ones((1, D), f32),
        "be1": jnp.zeros((1, D), f32),
        "w1":  0.1 * jax.random.normal(ks[3], (D, HID), f32),
        "b1":  0.02 * jax.random.normal(ks[4], (1, HID), f32),
        "w2":  0.1 * jax.random.normal(ks[5], (HID, D), f32),
        "b2":  0.02 * jax.random.normal(ks[6], (1, D), f32),
        "g2":  jnp.ones((1, D), f32),
        "be2": jnp.zeros((1, D), f32),
    }


if __name__ == "__main__":
    # Small but TPU-friendly shapes: lane-dense D=128, several query tiles.
    B, S, D = 2, 64, 128
    NUM_HEADS, WINDOW, HID = 4, 8, 256
    TQ = 16

    key = jax.random.PRNGKey(0)
    kx, kp = jax.random.split(key)
    x = jax.random.normal(kx, (B, S, D), jnp.float32)
    # Pad last 3 keys of batch row 1 (no query window is fully padded).
    padding_mask = jnp.ones((B, S), jnp.float32).at[1, -3:].set(0.0)
    params = init_params(kp, D, HID)

    out = encoder_layer(x, padding_mask, params,
                        num_heads=NUM_HEADS, window_size=WINDOW, tq=TQ)
    out = jax.block_until_ready(out)
    assert out.shape == (B, S, D)

    # Tight check against the bf16-mixed-precision reference (same cast points).
    ref_mixed = reference(x, padding_mask, params, num_heads=NUM_HEADS,
                          window_size=WINDOW, mixed=True)
    err_mixed = float(jnp.max(jnp.abs(out - ref_mixed)))
    assert jnp.allclose(out, ref_mixed, atol=2e-2, rtol=2e-2), err_mixed

    # Loose sanity check against faithful all-f32 math (catches logic bugs:
    # wrong band, missing residual, bad mask would all be O(1) off).
    ref_f32 = reference(x, padding_mask, params, num_heads=NUM_HEADS,
                        window_size=WINDOW, mixed=False)
    assert float(jnp.max(jnp.abs(out - ref_f32))) < 0.35

    print("KERNEL_OK")
</pallas_src>

<mosaic_0001>
module attributes {stable_mosaic.version = 11 : i64} {
  func.func @_encoder_kernel(%arg0: i32, %arg1: i32, %arg2: memref<1x64x128xf32, #tpu.memory_space<vmem>>, %arg3: memref<1x1x1x32xf32, #tpu.memory_space<vmem>>, %arg4: memref<128x128xbf16, #tpu.memory_space<vmem>>, %arg5: memref<1x128xf32, #tpu.memory_space<vmem>>, %arg6: memref<128x256xbf16, #tpu.memory_space<vmem>>, %arg7: memref<1x256xf32, #tpu.memory_space<vmem>>, %arg8: memref<128x128xbf16, #tpu.memory_space<vmem>>, %arg9: memref<1x128xf32, #tpu.memory_space<vmem>>, %arg10: memref<1x128xf32, #tpu.memory_space<vmem>>, %arg11: memref<1x128xf32, #tpu.memory_space<vmem>>, %arg12: memref<128x256xbf16, #tpu.memory_space<vmem>>, %arg13: memref<1x256xf32, #tpu.memory_space<vmem>>, %arg14: memref<256x128xbf16, #tpu.memory_space<vmem>>, %arg15: memref<1x128xf32, #tpu.memory_space<vmem>>, %arg16: memref<1x128xf32, #tpu.memory_space<vmem>>, %arg17: memref<1x128xf32, #tpu.memory_space<vmem>>, %arg18: memref<1x16x128xf32, #tpu.memory_space<vmem>>, %arg19: memref<16x128xf32, #tpu.memory_space<vmem>>) attributes {dimension_semantics = [#tpu.dimension_semantics<parallel>, #tpu.dimension_semantics<parallel>], iteration_bounds = array<i64: 2, 4>, scalar_prefetch = 0 : i64, scratch_operands = 1 : i64, tpu.core_type = #tpu.core_type<tc>, window_params = [{transform_indices = @transform_0, window_bounds = array<i64: 1, 64, 128>}, {transform_indices = @transform_1, window_bounds = array<i64: 1, 1, 1, 32>}, {pipeline_mode = #tpu.pipeline_mode<synchronous>, transform_indices = @transform_2, window_bounds = array<i64: 128, 128>}, {pipeline_mode = #tpu.pipeline_mode<synchronous>, transform_indices = @transform_3, window_bounds = array<i64: 1, 128>}, {pipeline_mode = #tpu.pipeline_mode<synchronous>, transform_indices = @transform_4, window_bounds = array<i64: 128, 256>}, {pipeline_mode = #tpu.pipeline_mode<synchronous>, transform_indices = @transform_5, window_bounds = array<i64: 1, 256>}, {pipeline_mode = #tpu.pipeline_mode<synchronous>, transform_indices = @transform_6, window_bounds = array<i64: 128, 128>}, {pipeline_mode = #tpu.pipeline_mode<synchronous>, transform_indices = @transform_7, window_bounds = array<i64: 1, 128>}, {pipeline_mode = #tpu.pipeline_mode<synchronous>, transform_indices = @transform_8, window_bounds = array<i64: 1, 128>}, {pipeline_mode = #tpu.pipeline_mode<synchronous>, transform_indices = @transform_9, window_bounds = array<i64: 1, 128>}, {pipeline_mode = #tpu.pipeline_mode<synchronous>, transform_indices = @transform_10, window_bounds = array<i64: 128, 256>}, {pipeline_mode = #tpu.pipeline_mode<synchronous>, transform_indices = @transform_11, window_bounds = array<i64: 1, 256>}, {pipeline_mode = #tpu.pipeline_mode<synchronous>, transform_indices = @transform_12, window_bounds = array<i64: 256, 128>}, {pipeline_mode = #tpu.pipeline_mode<synchronous>, transform_indices = @transform_13, window_bounds = array<i64: 1, 128>}, {pipeline_mode = #tpu.pipeline_mode<synchronous>, transform_indices = @transform_14, window_bounds = array<i64: 1, 128>}, {pipeline_mode = #tpu.pipeline_mode<synchronous>, transform_indices = @transform_15, window_bounds = array<i64: 1, 128>}, {transform_indices = @transform_16, window_bounds = array<i64: 1, 16, 128>}]} {
    %c16_i32 = arith.constant 16 : i32
    %0 = arith.muli %arg1, %c16_i32 : i32
    %c8_i32 = arith.constant 8 : i32
    %1 = arith.subi %0, %c8_i32 : i32
    %c0_i32 = arith.constant 0 : i32
    %2 = arith.maxsi %1, %c0_i32 : i32
    %c32_i32 = arith.constant 32 : i32
    %3 = arith.minsi %2, %c32_i32 : i32
    %4 = tpu.assume_multiple %0, 8 : i32
    %5 = tpu.assume_multiple %3, 8 : i32
    %c0 = arith.constant 0 : index
    %6 = arith.index_cast %4 : i32 to index
    %c0_0 = arith.constant 0 : index
    %7 = vector.load %arg2[%c0, %6, %c0_0] : memref<1x64x128xf32, #tpu.memory_space<vmem>>, vector<1x16x128xf32>
    %8 = vector.shape_cast %7 : vector<1x16x128xf32> to vector<16x128xf32>
    %c0_1 = arith.constant 0 : index
    %9 = arith.index_cast %5 : i32 to index
    %c0_2 = arith.constant 0 : index
    %10 = vector.load %arg2[%c0_1, %9, %c0_2] : memref<1x64x128xf32, #tpu.memory_space<vmem>>, vector<1x32x128xf32>
    %11 = vector.shape_cast %10 : vector<1x32x128xf32> to vector<32x128xf32>
    %12 = arith.truncf %8 : vector<16x128xf32> to vector<16x128xbf16>
    %c0_3 = arith.constant 0 : index
    %c0_4 = arith.constant 0 : index
    %13 = vector.load %arg4[%c0_3, %c0_4] : memref<128x128xbf16, #tpu.memory_space<vmem>>, vector<128x128xbf16>
    %cst = arith.constant dense<0.000000e+00> : vector<16x128xf32>
    %14 = tpu.matmul %12, %13, %cst {dimension_numbers = #tpu.dot_dimension_numbers<[1], [0], [0], [1], [0, 0, 1, 1], [], []>} : vector<16x128xbf16>, vector<128x128xbf16>, vector<16x128xf32> -> vector<16x128xf32>
    %c0_5 = arith.constant 0 : index
    %c0_6 = arith.constant 0 : index
    %15 = vector.load %arg5[%c0_5, %c0_6] : memref<1x128xf32, #tpu.memory_space<vmem>>, vector<1x128xf32>
    %16 = vector.broadcast %15 : vector<1x128xf32> to vector<16x128xf32>
    %17 = arith.addf %14, %16 : vector<16x128xf32>
    %18 = arith.truncf %11 : vector<32x128xf32> to vector<32x128xbf16>
    %c0_7 = arith.constant 0 : index
    %c0_8 = arith.constant 0 : index
    %19 = vector.load %arg6[%c0_7, %c0_8] : memref<128x256xbf16, #tpu.memory_space<vmem>>, vector<128x256xbf16>
    %cst_9 = arith.constant dense<0.000000e+00> : vector<32x256xf32>
    %20 = tpu.matmul %18, %19, %cst_9 {dimension_numbers = #tpu.dot_dimension_numbers<[1], [0], [0], [1], [0, 0, 1, 1], [], []>} : vector<32x128xbf16>, vector<128x256xbf16>, vector<32x256xf32> -> vector<32x256xf32>
    %c0_10 = arith.constant 0 : index
    %c0_11 = arith.constant 0 : index
    %21 = vector.load %arg7[%c0_10, %c0_11] : memref<1x256xf32, #tpu.memory_space<vmem>>, vector<1x256xf32>
    %22 = vector.broadcast %21 : vector<1x256xf32> to vector<32x256xf32>
    %23 = arith.addf %20, %22 : vector<32x256xf32>
    %cst_12 = arith.constant 0.176776692 : f32
    %24 = vector.broadcast %cst_12 : f32 to vector<16x128xf32>
    %25 = arith.mulf %17, %24 : vector<16x128xf32>
    %26 = arith.truncf %25 : vector<16x128xf32> to vector<16x128xbf16>
    %27 = vector.extract_strided_slice %23 {offsets = [0, 0], sizes = [32, 128], strides = [1, 1]} : vector<32x256xf32> to vector<32x128xf32>
    %28 = arith.truncf %27 : vector<32x128xf32> to vector<32x128xbf16>
    %29 = vector.extract_strided_slice %23 {offsets = [0, 128], sizes = [32, 128], strides = [1, 1]} : vector<32x256xf32> to vector<32x128xf32>
    %30 = arith.truncf %29 : vector<32x128xf32> to vector<32x128xbf16>
    %31 = tpu.iota {dimensions = array<i32: 0>} : vector<16x32xi32>
    %32 = vector.broadcast %4 : i32 to vector<16x32xi32>
    %33 = arith.addi %32, %31 : vector<16x32xi32>
    %34 = tpu.iota {dimensions = array<i32: 1>} : vector<16x32xi32>
    %35 = vector.broadcast %5 : i32 to vector<16x32xi32>
    %36 = arith.addi %35, %34 : vector<16x32xi32>
    %37 = arith.subi %33, %36 : vector<16x32xi32>
    %38 = math.absi %37 : vector<16x32xi32>
    %c4_i32 = arith.constant 4 : i32
    %39 = vector.broadcast %c4_i32 : i32 to vector<16x32xi32>
    %40 = arith.cmpi sle, %38, %39 : vector<16x32xi32>
    %cst_13 = arith.constant 0.000000e+00 : f32
    %cst_14 = arith.constant -9.000000e+15 : f32
    %41 = vector.broadcast %cst_13 : f32 to vector<16x32xf32>
    %42 = vector.broadcast %cst_14 : f32 to vector<16x32xf32>
    %43 = arith.select %40, %41, %42 : vector<16x32xi1>, vector<16x32xf32>
    %c0_15 = arith.constant 0 : index
    %c0_16 = arith.constant 0 : index
    %c0_17 = arith.constant 0 : index
    %c0_18 = arith.constant 0 : index
    %44 = vector.load %arg3[%c0_15, %c0_16, %c0_17, %c0_18] : memref<1x1x1x32xf32, #tpu.memory_space<vmem>>, vector<1x1x1x32xf32>
    %45 = vector.shape_cast %44 : vector<1x1x1x32xf32> to vector<1x32xf32>
    %46 = vector.broadcast %45 : vector<1x32xf32> to vector<16x32xf32>
    %47 = arith.addf %43, %46 : vector<16x32xf32>
    %48 = vector.extract_strided_slice %26 {offsets = [0, 0], sizes = [16, 32], strides = [1, 1]} : vector<16x128xbf16> to vector<16x32xbf16>
    %49 = vector.extract_strided_slice %28 {offsets = [0, 0], sizes = [32, 32], strides = [1, 1]} : vector<32x128xbf16> to vector<32x32xbf16>
    %cst_19 = arith.constant dense<0.000000e+00> : vector<16x32xf32>
    %50 = tpu.matmul %48, %49, %cst_19 {dimension_numbers = #tpu.dot_dimension_numbers<[1], [1], [0], [0], [0, 0, 1, 0], [], []>} : vector<16x32xbf16>, vector<32x32xbf16>, vector<16x32xf32> -> vector<16x32xf32>
    %51 = arith.addf %50, %47 : vector<16x32xf32>
    %cst_20 = arith.constant dense<0xFF800000> : vector<16xf32>
    %52 = vector.multi_reduction <maximumf>, %51, %cst_20 [1] : vector<16x32xf32> to vector<16xf32>
    %53 = vector.shape_cast %52 : vector<16xf32> to vector<16x1xf32>
    %54 = vector.broadcast %53 : vector<16x1xf32> to vector<16x32xf32>
    %55 = arith.subf %51, %54 : vector<16x32xf32>
    %56 = math.exp %55 : vector<16x32xf32>
    %cst_21 = arith.constant dense<0.000000e+00> : vector<16xf32>
    %57 = vector.multi_reduction <add>, %56, %cst_21 [1] : vector<16x32xf32> to vector<16xf32>
    %58 = vector.shape_cast %57 : vector<16xf32> to vector<16x1xf32>
    %59 = vector.broadcast %58 : vector<16x1xf32> to vector<16x32xf32>
    %60 = arith.divf %56, %59 : vector<16x32xf32>
    %61 = arith.truncf %60 : vector<16x32xf32> to vector<16x32xbf16>
    %62 = vector.extract_strided_slice %30 {offsets = [0, 0], sizes = [32, 32], strides = [1, 1]} : vector<32x128xbf16> to vector<32x32xbf16>
    %cst_22 = arith.constant dense<0.000000e+00> : vector<16x32xf32>
    %63 = tpu.matmul %61, %62, %cst_22 {dimension_numbers = #tpu.dot_dimension_numbers<[1], [0], [0], [1], [0, 0, 1, 1], [], []>} : vector<16x32xbf16>, vector<32x32xbf16>, vector<16x32xf32> -> vector<16x32xf32>
    %c0_23 = arith.constant 0 : index
    %c0_24 = arith.constant 0 : index
    %64 = vector.load %arg19[%c0_23, %c0_24] : memref<16x128xf32, #tpu.memory_space<vmem>>, vector<16x32xf32>
    tpu.vector_store %arg19[%c0_23, %c0_24], %63 {strides = array<i32>} : memref<16x128xf32, #tpu.memory_space<vmem>>, vector<16x32xf32>,
    %65 = vector.extract_strided_slice %26 {offsets = [0, 32], sizes = [16, 32], strides = [1, 1]} : vector<16x128xbf16> to vector<16x32xbf16>
    %66 = vector.extract_strided_slice %28 {offsets = [0, 32], sizes = [32, 32], strides = [1, 1]} : vector<32x128xbf16> to vector<32x32xbf16>
    %cst_25 = arith.constant dense<0.000000e+00> : vector<16x32xf32>
    %67 = tpu.matmul %65, %66, %cst_25 {dimension_numbers = #tpu.dot_dimension_numbers<[1], [1], [0], [0], [0, 0, 1, 0], [], []>} : vector<16x32xbf16>, vector<32x32xbf16>, vector<16x32xf32> -> vector<16x32xf32>
    %68 = arith.addf %67, %47 : vector<16x32xf32>
    %cst_26 = arith.constant dense<0xFF800000> : vector<16xf32>
    %69 = vector.multi_reduction <maximumf>, %68, %cst_26 [1] : vector<16x32xf32> to vector<16xf32>
    %70 = vector.shape_cast %69 : vector<16xf32> to vector<16x1xf32>
    %71 = vector.broadcast %70 : vector<16x1xf32> to vector<16x32xf32>
    %72 = arith.subf %68, %71 : vector<16x32xf32>
    %73 = math.exp %72 : vector<16x32xf32>
    %cst_27 = arith.constant dense<0.000000e+00> : vector<16xf32>
    %74 = vector.multi_reduction <add>, %73, %cst_27 [1] : vector<16x32xf32> to vector<16xf32>
    %75 = vector.shape_cast %74 : vector<16xf32> to vector<16x1xf32>
    %76 = vector.broadcast %75 : vector<16x1xf32> to vector<16x32xf32>
    %77 = arith.divf %73, %76 : vector<16x32xf32>
    %78 = arith.truncf %77 : vector<16x32xf32> to vector<16x32xbf16>
    %79 = vector.extract_strided_slice %30 {offsets = [0, 32], sizes = [32, 32], strides = [1, 1]} : vector<32x128xbf16> to vector<32x32xbf16>
    %cst_28 = arith.constant dense<0.000000e+00> : vector<16x32xf32>
    %80 = tpu.matmul %78, %79, %cst_28 {dimension_numbers = #tpu.dot_dimension_numbers<[1], [0], [0], [1], [0, 0, 1, 1], [], []>} : vector<16x32xbf16>, vector<32x32xbf16>, vector<16x32xf32> -> vector<16x32xf32>
    %c0_29 = arith.constant 0 : index
    %c32 = arith.constant 32 : index
    %81 = vector.load %arg19[%c0_29, %c32] : memref<16x128xf32, #tpu.memory_space<vmem>>, vector<16x32xf32>
    tpu.vector_store %arg19[%c0_29, %c32], %80 {strides = array<i32>} : memref<16x128xf32, #tpu.memory_space<vmem>>, vector<16x32xf32>,
    %82 = vector.extract_strided_slice %26 {offsets = [0, 64], sizes = [16, 32], strides = [1, 1]} : vector<16x128xbf16> to vector<16x32xbf16>
    %83 = vector.extract_strided_slice %28 {offsets = [0, 64], sizes = [32, 32], strides = [1, 1]} : vector<32x128xbf16> to vector<32x32xbf16>
    %cst_30 = arith.constant dense<0.000000e+00> : vector<16x32xf32>
    %84 = tpu.matmul %82, %83, %cst_30 {dimension_numbers = #tpu.dot_dimension_numbers<[1], [1], [0], [0], [0, 0, 1, 0], [], []>} : vector<16x32xbf16>, vector<32x32xbf16>, vector<16x32xf32> -> vector<16x32xf32>
    %85 = arith.addf %84, %47 : vector<16x32xf32>
    %cst_31 = arith.constant dense<0xFF800000> : vector<16xf32>
    %86 = vector.multi_reduction <maximumf>, %85, %cst_31 [1] : vector<16x32xf32> to vector<16xf32>
    %87 = vector.shape_cast %86 : vector<16xf32> to vector<16x1xf32>
    %88 = vector.broadcast %87 : vector<16x1xf32> to vector<16x32xf32>
    %89 = arith.subf %85, %88 : vector<16x32xf32>
    %90 = math.exp %89 : vector<16x32xf32>
    %cst_32 = arith.constant dense<0.000000e+00> : vector<16xf32>
    %91 = vector.multi_reduction <add>, %90, %cst_32 [1] : vector<16x32xf32> to vector<16xf32>
    %92 = vector.shape_cast %91 : vector<16xf32> to vector<16x1xf32>
    %93 = vector.broadcast %92 : vector<16x1xf32> to vector<16x32xf32>
    %94 = arith.divf %90, %93 : vector<16x32xf32>
    %95 = arith.truncf %94 : vector<16x32xf32> to vector<16x32xbf16>
    %96 = vector.extract_strided_slice %30 {offsets = [0, 64], sizes = [32, 32], strides = [1, 1]} : vector<32x128xbf16> to vector<32x32xbf16>
    %cst_33 = arith.constant dense<0.000000e+00> : vector<16x32xf32>
    %97 = tpu.matmul %95, %96, %cst_33 {dimension_numbers = #tpu.dot_dimension_numbers<[1], [0], [0], [1], [0, 0, 1, 1], [], []>} : vector<16x32xbf16>, vector<32x32xbf16>, vector<16x32xf32> -> vector<16x32xf32>
    %c0_34 = arith.constant 0 : index
    %c64 = arith.constant 64 : index
    %98 = vector.load %arg19[%c0_34, %c64] : memref<16x128xf32, #tpu.memory_space<vmem>>, vector<16x32xf32>
    tpu.vector_store %arg19[%c0_34, %c64], %97 {strides = array<i32>} : memref<16x128xf32, #tpu.memory_space<vmem>>, vector<16x32xf32>,
    %99 = vector.extract_strided_slice %26 {offsets = [0, 96], sizes = [16, 32], strides = [1, 1]} : vector<16x128xbf16> to vector<16x32xbf16>
    %100 = vector.extract_strided_slice %28 {offsets = [0, 96], sizes = [32, 32], strides = [1, 1]} : vector<32x128xbf16> to vector<32x32xbf16>
    %cst_35 = arith.constant dense<0.000000e+00> : vector<16x32xf32>
    %101 = tpu.matmul %99, %100, %cst_35 {dimension_numbers = #tpu.dot_dimension_numbers<[1], [1], [0], [0], [0, 0, 1, 0], [], []>} : vector<16x32xbf16>, vector<32x32xbf16>, vector<16x32xf32> -> vector<16x32xf32>
    %102 = arith.addf %101, %47 : vector<16x32xf32>
    %cst_36 = arith.constant dense<0xFF800000> : vector<16xf32>
    %103 = vector.multi_reduction <maximumf>, %102, %cst_36 [1] : vector<16x32xf32> to vector<16xf32>
    %104 = vector.shape_cast %103 : vector<16xf32> to vector<16x1xf32>
    %105 = vector.broadcast %104 : vector<16x1xf32> to vector<16x32xf32>
    %106 = arith.subf %102, %105 : vector<16x32xf32>
    %107 = math.exp %106 : vector<16x32xf32>
    %cst_37 = arith.constant dense<0.000000e+00> : vector<16xf32>
    %108 = vector.multi_reduction <add>, %107, %cst_37 [1] : vector<16x32xf32> to vector<16xf32>
    %109 = vector.shape_cast %108 : vector<16xf32> to vector<16x1xf32>
    %110 = vector.broadcast %109 : vector<16x1xf32> to vector<16x32xf32>
    %111 = arith.divf %107, %110 : vector<16x32xf32>
    %112 = arith.truncf %111 : vector<16x32xf32> to vector<16x32xbf16>
    %113 = vector.extract_strided_slice %30 {offsets = [0, 96], sizes = [32, 32], strides = [1, 1]} : vector<32x128xbf16> to vector<32x32xbf16>
    %cst_38 = arith.constant dense<0.000000e+00> : vector<16x32xf32>
    %114 = tpu.matmul %112, %113, %cst_38 {dimension_numbers = #tpu.dot_dimension_numbers<[1], [0], [0], [1], [0, 0, 1, 1], [], []>} : vector<16x32xbf16>, vector<32x32xbf16>, vector<16x32xf32> -> vector<16x32xf32>
    %c0_39 = arith.constant 0 : index
    %c96 = arith.constant 96 : index
    %115 = vector.load %arg19[%c0_39, %c96] : memref<16x128xf32, #tpu.memory_space<vmem>>, vector<16x32xf32>
    tpu.vector_store %arg19[%c0_39, %c96], %114 {strides = array<i32>} : memref<16x128xf32, #tpu.memory_space<vmem>>, vector<16x32xf32>,
    %c0_40 = arith.constant 0 : index
    %c0_41 = arith.constant 0 : index
    %116 = vector.load %arg19[%c0_40, %c0_41] : memref<16x128xf32, #tpu.memory_space<vmem>>, vector<16x128xf32>
    %117 = arith.truncf %116 : vector<16x128xf32> to vector<16x128xbf16>
    %c0_42 = arith.constant 0 : index
    %c0_43 = arith.constant 0 : index
    %118 = vector.load %arg8[%c0_42, %c0_43] : memref<128x128xbf16, #tpu.memory_space<vmem>>, vector<128x128xbf16>
    %cst_44 = arith.constant dense<0.000000e+00> : vector<16x128xf32>
    %119 = tpu.matmul %117, %118, %cst_44 {dimension_numbers = #tpu.dot_dimension_numbers<[1], [0], [0], [1], [0, 0, 1, 1], [], []>} : vector<16x128xbf16>, vector<128x128xbf16>, vector<16x128xf32> -> vector<16x128xf32>
    %c0_45 = arith.constant 0 : index
    %c0_46 = arith.constant 0 : index
    %120 = vector.load %arg9[%c0_45, %c0_46] : memref<1x128xf32, #tpu.memory_space<vmem>>, vector<1x128xf32>
    %121 = vector.broadcast %120 : vector<1x128xf32> to vector<16x128xf32>
    %122 = arith.addf %119, %121 : vector<16x128xf32>
    %123 = arith.addf %8, %122 : vector<16x128xf32>
    %c0_47 = arith.constant 0 : index
    %c0_48 = arith.constant 0 : index
    %124 = vector.load %arg10[%c0_47, %c0_48] : memref<1x128xf32, #tpu.memory_space<vmem>>, vector<1x128xf32>
    %c0_49 = arith.constant 0 : index
    %c0_50 = arith.constant 0 : index
    %125 = vector.load %arg11[%c0_49, %c0_50] : memref<1x128xf32, #tpu.memory_space<vmem>>, vector<1x128xf32>
    %cst_51 = arith.constant dense<0.000000e+00> : vector<16xf32>
    %126 = vector.multi_reduction <add>, %123, %cst_51 [1] : vector<16x128xf32> to vector<16xf32>
    %127 = vector.shape_cast %126 : vector<16xf32> to vector<16x1xf32>
    %cst_52 = arith.constant 1.280000e+02 : f32
    %128 = vector.broadcast %cst_52 : f32 to vector<16x1xf32>
    %129 = arith.divf %127, %128 : vector<16x1xf32>
    %130 = vector.broadcast %129 : vector<16x1xf32> to vector<16x128xf32>
    %131 = arith.subf %123, %130 : vector<16x128xf32>
    %132 = arith.mulf %131, %131 : vector<16x128xf32>
    %cst_53 = arith.constant dense<0.000000e+00> : vector<16xf32>
    %133 = vector.multi_reduction <add>, %132, %cst_53 [1] : vector<16x128xf32> to vector<16xf32>
    %134 = vector.shape_cast %133 : vector<16xf32> to vector<16x1xf32>
    %cst_54 = arith.constant 1.280000e+02 : f32
    %135 = vector.broadcast %cst_54 : f32 to vector<16x1xf32>
    %136 = arith.divf %134, %135 : vector<16x1xf32>
    %137 = vector.broadcast %129 : vector<16x1xf32> to vector<16x128xf32>
    %138 = arith.subf %123, %137 : vector<16x128xf32>
    %cst_55 = arith.constant 9.99999974E-6 : f32
    %139 = vector.broadcast %cst_55 : f32 to vector<16x1xf32>
    %140 = arith.addf %136, %139 : vector<16x1xf32>
    %141 = math.rsqrt %140 : vector<16x1xf32>
    %142 = vector.broadcast %141 : vector<16x1xf32> to vector<16x128xf32>
    %143 = arith.mulf %138, %142 : vector<16x128xf32>
    %144 = vector.broadcast %124 : vector<1x128xf32> to vector<16x128xf32>
    %145 = arith.mulf %143, %144 : vector<16x128xf32>
    %146 = vector.broadcast %125 : vector<1x128xf32> to vector<16x128xf32>
    %147 = arith.addf %145, %146 : vector<16x128xf32>
    %148 = arith.truncf %147 : vector<16x128xf32> to vector<16x128xbf16>
    %c0_56 = arith.constant 0 : index
    %c0_57 = arith.constant 0 : index
    %149 = vector.load %arg12[%c0_56, %c0_57] : memref<128x256xbf16, #tpu.memory_space<vmem>>, vector<128x256xbf16>
    %cst_58 = arith.constant dense<0.000000e+00> : vector<16x256xf32>
    %150 = tpu.matmul %148, %149, %cst_58 {dimension_numbers = #tpu.dot_dimension_numbers<[1], [0], [0], [1], [0, 0, 1, 1], [], []>} : vector<16x128xbf16>, vector<128x256xbf16>, vector<16x256xf32> -> vector<16x256xf32>
    %c0_59 = arith.constant 0 : index
    %c0_60 = arith.constant 0 : index
    %151 = vector.load %arg13[%c0_59, %c0_60] : memref<1x256xf32, #tpu.memory_space<vmem>>, vector<1x256xf32>
    %152 = vector.broadcast %151 : vector<1x256xf32> to vector<16x256xf32>
    %153 = arith.addf %150, %152 : vector<16x256xf32>
    %cst_61 = arith.constant 5.000000e-01 : f32
    %154 = vector.broadcast %cst_61 : f32 to vector<16x256xf32>
    %155 = arith.mulf %154, %153 : vector<16x256xf32>
    %cst_62 = arith.constant 0.707106769 : f32
    %156 = vector.broadcast %cst_62 : f32 to vector<16x256xf32>
    %157 = arith.mulf %153, %156 : vector<16x256xf32>
    %158 = math.erf %157 : vector<16x256xf32>
    %cst_63 = arith.constant 1.000000e+00 : f32
    %159 = vector.broadcast %cst_63 : f32 to vector<16x256xf32>
    %160 = arith.addf %159, %158 : vector<16x256xf32>
    %161 = arith.mulf %155, %160 : vector<16x256xf32>
    %162 = arith.truncf %161 : vector<16x256xf32> to vector<16x256xbf16>
    %c0_64 = arith.constant 0 : index
    %c0_65 = arith.constant 0 : index
    %163 = vector.load %arg14[%c0_64, %c0_65] : memref<256x128xbf16, #tpu.memory_space<vmem>>, vector<256x128xbf16>
    %cst_66 = arith.constant dense<0.000000e+00> : vector<16x128xf32>
    %164 = tpu.matmul %162, %163, %cst_66 {dimension_numbers = #tpu.dot_dimension_numbers<[1], [0], [0], [1], [0, 0, 1, 1], [], []>} : vector<16x256xbf16>, vector<256x128xbf16>, vector<16x128xf32> -> vector<16x128xf32>
    %c0_67 = arith.constant 0 : index
    %c0_68 = arith.constant 0 : index
    %165 = vector.load %arg15[%c0_67, %c0_68] : memref<1x128xf32, #tpu.memory_space<vmem>>, vector<1x128xf32>
    %166 = vector.broadcast %165 : vector<1x128xf32> to vector<16x128xf32>
    %167 = arith.addf %164, %166 : vector<16x128xf32>
    %168 = arith.addf %147, %167 : vector<16x128xf32>
    %c0_69 = arith.constant 0 : index
    %c0_70 = arith.constant 0 : index
    %169 = vector.load %arg16[%c0_69, %c0_70] : memref<1x128xf32, #tpu.memory_space<vmem>>, vector<1x128xf32>
    %c0_71 = arith.constant 0 : index
    %c0_72 = arith.constant 0 : index
    %170 = vector.load %arg17[%c0_71, %c0_72] : memref<1x128xf32, #tpu.memory_space<vmem>>, vector<1x128xf32>
    %cst_73 = arith.constant dense<0.000000e+00> : vector<16xf32>
    %171 = vector.multi_reduction <add>, %168, %cst_73 [1] : vector<16x128xf32> to vector<16xf32>
    %172 = vector.shape_cast %171 : vector<16xf32> to vector<16x1xf32>
    %cst_74 = arith.constant 1.280000e+02 : f32
    %173 = vector.broadcast %cst_74 : f32 to vector<16x1xf32>
    %174 = arith.divf %172, %173 : vector<16x1xf32>
    %175 = vector.broadcast %174 : vector<16x1xf32> to vector<16x128xf32>
    %176 = arith.subf %168, %175 : vector<16x128xf32>
    %177 = arith.mulf %176, %176 : vector<16x128xf32>
    %cst_75 = arith.constant dense<0.000000e+00> : vector<16xf32>
    %178 = vector.multi_reduction <add>, %177, %cst_75 [1] : vector<16x128xf32> to vector<16xf32>
    %179 = vector.shape_cast %178 : vector<16xf32> to vector<16x1xf32>
    %cst_76 = arith.constant 1.280000e+02 : f32
    %180 = vector.broadcast %cst_76 : f32 to vector<16x1xf32>
    %181 = arith.divf %179, %180 : vector<16x1xf32>
    %182 = vector.broadcast %174 : vector<16x1xf32> to vector<16x128xf32>
    %183 = arith.subf %168, %182 : vector<16x128xf32>
    %cst_77 = arith.constant 9.99999974E-6 : f32
    %184 = vector.broadcast %cst_77 : f32 to vector<16x1xf32>
    %185 = arith.addf %181, %184 : vector<16x1xf32>
    %186 = math.rsqrt %185 : vector<16x1xf32>
    %187 = vector.broadcast %186 : vector<16x1xf32> to vector<16x128xf32>
    %188 = arith.mulf %183, %187 : vector<16x128xf32>
    %189 = vector.broadcast %169 : vector<1x128xf32> to vector<16x128xf32>
    %190 = arith.mulf %188, %189 : vector<16x128xf32>
    %191 = vector.broadcast %170 : vector<1x128xf32> to vector<16x128xf32>
    %192 = arith.addf %190, %191 : vector<16x128xf32>
    %c0_78 = arith.constant 0 : index
    %c0_79 = arith.constant 0 : index
    %c0_80 = arith.constant 0 : index
    %193 = vector.load %arg18[%c0_78, %c0_79, %c0_80] : memref<1x16x128xf32, #tpu.memory_space<vmem>>, vector<1x16x128xf32>
    %194 = vector.shape_cast %193 : vector<1x16x128xf32> to vector<16x128xf32>
    %195 = vector.shape_cast %192 : vector<16x128xf32> to vector<1x16x128xf32>
    tpu.vector_store %arg18[%c0_78, %c0_79, %c0_80], %195 {strides = array<i32>} : memref<1x16x128xf32, #tpu.memory_space<vmem>>, vector<1x16x128xf32>,
    return
  }
  func.func @transform_0(%arg0: i32, %arg1: i32) -> (i32, i32, i32) {
    %c0_i32 = arith.constant 0 : i32
    %c0_i32_0 = arith.constant 0 : i32
    %c0_i32_1 = arith.constant 0 : i32
    return %arg0, %c0_i32, %c0_i32_0 : i32, i32, i32
  }
  func.func @transform_1(%arg0: i32, %arg1: i32) -> (i32, i32, i32, i32) {
    %c0_i32 = arith.constant 0 : i32
    %c0_i32_0 = arith.constant 0 : i32
    %c0_i32_1 = arith.constant 0 : i32
    return %arg0, %arg1, %c0_i32, %c0_i32_0 : i32, i32, i32, i32
  }
  func.func @transform_2(%arg0: i32, %arg1: i32) -> (i32, i32) {
    %c0_i32 = arith.constant 0 : i32
    %c0_i32_0 = arith.constant 0 : i32
    %c0_i32_1 = arith.constant 0 : i32
    return %c0_i32, %c0_i32_0 : i32, i32
  }
  func.func @transform_3(%arg0: i32, %arg1: i32) -> (i32, i32) {
    %c0_i32 = arith.constant 0 : i32
    %c0_i32_0 = arith.constant 0 : i32
    %c0_i32_1 = arith.constant 0 : i32
    return %c0_i32, %c0_i32_0 : i32, i32
  }
  func.func @transform_4(%arg0: i32, %arg1: i32) -> (i32, i32) {
    %c0_i32 = arith.constant 0 : i32
    %c0_i32_0 = arith.constant 0 : i32
    %c0_i32_1 = arith.constant 0 : i32
    return %c0_i32, %c0_i32_0 : i32, i32
  }
  func.func @transform_5(%arg0: i32, %arg1: i32) -> (i32, i32) {
    %c0_i32 = arith.constant 0 : i32
    %c0_i32_0 = arith.constant 0 : i32
    %c0_i32_1 = arith.constant 0 : i32
    return %c0_i32, %c0_i32_0 : i32, i32
  }
  func.func @transform_6(%arg0: i32, %arg1: i32) -> (i32, i32) {
    %c0_i32 = arith.constant 0 : i32
    %c0_i32_0 = arith.constant 0 : i32
    %c0_i32_1 = arith.constant 0 : i32
    return %c0_i32, %c0_i32_0 : i32, i32
  }
  func.func @transform_7(%arg0: i32, %arg1: i32) -> (i32, i32) {
    %c0_i32 = arith.constant 0 : i32
    %c0_i32_0 = arith.constant 0 : i32
    %c0_i32_1 = arith.constant 0 : i32
    return %c0_i32, %c0_i32_0 : i32, i32
  }
  func.func @transform_8(%arg0: i32, %arg1: i32) -> (i32, i32) {
    %c0_i32 = arith.constant 0 : i32
    %c0_i32_0 = arith.constant 0 : i32
    %c0_i32_1 = arith.constant 0 : i32
    return %c0_i32, %c0_i32_0 : i32, i32
  }
  func.func @transform_9(%arg0: i32, %arg1: i32) -> (i32, i32) {
    %c0_i32 = arith.constant 0 : i32
    %c0_i32_0 = arith.constant 0 : i32
    %c0_i32_1 = arith.constant 0 : i32
    return %c0_i32, %c0_i32_0 : i32, i32
  }
  func.func @transform_10(%arg0: i32, %arg1: i32) -> (i32, i32) {
    %c0_i32 = arith.constant 0 : i32
    %c0_i32_0 = arith.constant 0 : i32
    %c0_i32_1 = arith.constant 0 : i32
    return %c0_i32, %c0_i32_0 : i32, i32
  }
  func.func @transform_11(%arg0: i32, %arg1: i32) -> (i32, i32) {
    %c0_i32 = arith.constant 0 : i32
    %c0_i32_0 = arith.constant 0 : i32
    %c0_i32_1 = arith.constant 0 : i32
    return %c0_i32, %c0_i32_0 : i32, i32
  }
  func.func @transform_12(%arg0: i32, %arg1: i32) -> (i32, i32) {
    %c0_i32 = arith.constant 0 : i32
    %c0_i32_0 = arith.constant 0 : i32
    %c0_i32_1 = arith.constant 0 : i32
    return %c0_i32, %c0_i32_0 : i32, i32
  }
  func.func @transform_13(%arg0: i32, %arg1: i32) -> (i32, i32) {
    %c0_i32 = arith.constant 0 : i32
    %c0_i32_0 = arith.constant 0 : i32
    %c0_i32_1 = arith.constant 0 : i32
    return %c0_i32, %c0_i32_0 : i32, i32
  }
  func.func @transform_14(%arg0: i32, %arg1: i32) -> (i32, i32) {
    %c0_i32 = arith.constant 0 : i32
    %c0_i32_0 = arith.constant 0 : i32
    %c0_i32_1 = arith.constant 0 : i32
    return %c0_i32, %c0_i32_0 : i32, i32
  }
  func.func @transform_15(%arg0: i32, %arg1: i32) -> (i32, i32) {
    %c0_i32 = arith.constant 0 : i32
    %c0_i32_0 = arith.constant 0 : i32
    %c0_i32_1 = arith.constant 0 : i32
    return %c0_i32, %c0_i32_0 : i32, i32
  }
  func.func @transform_16(%arg0: i32, %arg1: i32) -> (i32, i32, i32) {
    %c0_i32 = arith.constant 0 : i32
    %c0_i32_0 = arith.constant 0 : i32
    return %arg0, %arg1, %c0_i32 : i32, i32, i32
  }
}

</mosaic_0001>

<llo_original>
// kernel: tpu_custom_call.1
$region0: #{tpu_custom_call.1}
  #allocation0 [shape = 'u32[]', space=smem, size = 0x4, offset = 0x4, fixed_abs, tag = 'smem constant byte address 0x4 - core index']
  #allocation1 [shape = 'u32[144,128]{1,0:T(1,128)}', space=vmem, size = 0x12000, scoped, tag = 'internal scratch']
  #allocation2 [shape = 'f32[16,128]{1,0:T(8,128)}', space=vmem, size = 0x2000, scoped, tag = 'scratch operand']
  %s0 = inlined_call_operand.hbm [shape: f32[2,64,128], index: 0, kind: input, shape index: {}]
  %s1 = inlined_call_operand.hbm [shape: f32[2,4,1,32], index: 1, kind: input, shape index: {}]
  %s2 = inlined_call_operand.hbm [shape: bf16[128,128], index: 2, kind: input, shape index: {}]
  %s3 = inlined_call_operand.vmem [shape: f32[1,128], index: 3, kind: input, shape index: {}]
  %s4 = inlined_call_operand.hbm [shape: bf16[128,256], index: 4, kind: input, shape index: {}]
  %s5 = inlined_call_operand.vmem [shape: f32[1,256], index: 5, kind: input, shape index: {}]
  %s6 = inlined_call_operand.hbm [shape: bf16[128,128], index: 6, kind: input, shape index: {}]
  %s7 = inlined_call_operand.vmem [shape: f32[1,128], index: 7, kind: input, shape index: {}]
  %s8 = inlined_call_operand.vmem [shape: f32[1,128], index: 8, kind: input, shape index: {}]
  %s9 = inlined_call_operand.vmem [shape: f32[1,128], index: 9, kind: input, shape index: {}]
  %s10 = inlined_call_operand.hbm [shape: bf16[128,256], index: 10, kind: input, shape index: {}]
  %s11 = inlined_call_operand.vmem [shape: f32[1,256], index: 11, kind: input, shape index: {}]
  %s12 = inlined_call_operand.hbm [shape: bf16[256,128], index: 12, kind: input, shape index: {}]
  %s13 = inlined_call_operand.vmem [shape: f32[1,128], index: 13, kind: input, shape index: {}]
  %s14 = inlined_call_operand.vmem [shape: f32[1,128], index: 14, kind: input, shape index: {}]
  %s15 = inlined_call_operand.vmem [shape: f32[1,128], index: 15, kind: input, shape index: {}]
  %s16 = inlined_call_operand.hbm [shape: f32[2,64,128], index: 16, kind: output, shape index: {}]
  %s17 = sld [smem:[#allocation0]]
  $region125: #{tpu_custom_call.1} parent=0
    _
  %s19 = ssub.s32 1, %s17
  %s20 = scalar_select 0, %s19, %s17
  $region1: #{tpu_custom_call.1} parent=0
    #allocation3 [shape = 'u8[65536]{0}', space=vmem, size = 0x10000, scoped, tag = 'input window, operand 0']
    #allocation4 [shape = 's32[2]{0}', space=sflag, size = 0x8, scoped, tag = 'scoped memory for tpu_custom_call.1']
    #allocation5 [shape = 's32[2]{0}', space=sflag, size = 0x8, scoped, tag = 'scoped memory for tpu_custom_call.1']
    #allocation6 [shape = 'u8[1024]{0}', space=vmem, size = 0x400, scoped, tag = 'input window, operand 1']
    #allocation7 [shape = 's32[2]{0}', space=sflag, size = 0x8, scoped, tag = 'scoped memory for tpu_custom_call.1']
    #allocation8 [shape = 'u8[32768]{0}', space=vmem, size = 0x8000, scoped, tag = 'input window, operand 2, single buffered']
    #allocation9 [shape = 'u8[65536]{0}', space=vmem, size = 0x10000, scoped, tag = 'input window, operand 4, single buffered']
    #allocation10 [shape = 's32[1]{0}', space=sflag, size = 0x4, scoped, tag = 'scoped memory for tpu_custom_call.1']
    #allocation11 [shape = 'u8[32768]{0}', space=vmem, size = 0x8000, scoped, tag = 'input window, operand 6, single buffered']
    #allocation12 [shape = 'u8[65536]{0}', space=vmem, size = 0x10000, scoped, tag = 'input window, operand 10, single buffered']
    #allocation13 [shape = 's32[1]{0}', space=sflag, size = 0x4, scoped, tag = 'scoped memory for tpu_custom_call.1']
    #allocation14 [shape = 'u8[65536]{0}', space=vmem, size = 0x10000, scoped, tag = 'input window, operand 12, single buffered']
    #allocation15 [shape = 'u8[16384]{0}', space=vmem, size = 0x4000, scoped, tag = 'output window, operand 0']
    %21 = vsyncpa [#allocation4], 0
    %s22 = scalar_lea.sflag [#allocation4], 1
    %23 = vsyncpa %s22, 0
    %24 = vsyncpa [#allocation7], 0
    %s25 = scalar_lea.sflag [#allocation7], 1
    %26 = vsyncpa %s25, 0
    %27 = vsyncpa [#allocation10], 0
    %28 = vsyncpa [#allocation13], 0
    %29 = vsyncpa [#allocation5], 0
    %s30 = scalar_lea.sflag [#allocation5], 1
    %31 = vsyncpa %s30, 0
    loop: start=0, step=1, limit=10
    $region2: #{tpu_custom_call.1} parent=1 // loop_pre_header
      _
    $region3: #{tpu_custom_call.1} parent=1 // loop_header
      %s33 = sphi 0, %s37
      %p34 = scmp.ge.s32.totalorder %s33, 10
      %s40 = sphi 0, %s52
      %s41 = sphi 0, %s48
      %s42 = sphi 0, %s40
      %s43 = sphi 0, %s41
      %s44 = sphi 0, %s42
      %s45 = sphi 0, %s43
      %s55 = sphi 0, %s57
      %s58 = sphi 0, %s55
      %s59 = sphi 0, %s58
      %s75 = sphi 0, %s59
      %s83 = sphi 0, %s85
      %s86 = sphi 0, %s83
      %s87 = sphi 0, %s86
      %s103 = sphi 0, %s87
      %s107 = sphi 0, %s107
      %s109 = sphi 0, %s107
      %s110 = sphi 0, %s109
      %s124 = sphi 0, %s110
      %s128 = sphi 0, %s128
      %s130 = sphi 0, %s128
      %s131 = sphi 0, %s130
      %s145 = sphi 0, %s131
      %s149 = sphi 0, %s149
      %s151 = sphi 0, %s149
      %s152 = sphi 0, %s151
      %s166 = sphi 0, %s152
      %s170 = sphi 0, %s170
      %s172 = sphi 0, %s170
      %s173 = sphi 0, %s172
      %s187 = sphi 0, %s173
      %s191 = sphi 0, %s191
      %s193 = sphi 0, %s191
      %s194 = sphi 0, %s193
      %s208 = sphi 0, %s194
      %s212 = sphi 0, %s212
      %s214 = sphi 0, %s212
      %s215 = sphi 0, %s214
      %s229 = sphi 0, %s215
      %s233 = sphi 0, %s233
      %s235 = sphi 0, %s233
      %s236 = sphi 0, %s235
      %s250 = sphi 0, %s236
      %s254 = sphi 0, %s254
      %s256 = sphi 0, %s254
      %s257 = sphi 0, %s256
      %s271 = sphi 0, %s257
      %s275 = sphi 0, %s275
      %s277 = sphi 0, %s275
      %s278 = sphi 0, %s277
      %s292 = sphi 0, %s278
      %s296 = sphi 0, %s296
      %s298 = sphi 0, %s296
      %s299 = sphi 0, %s298
      %s313 = sphi 0, %s299
      %s317 = sphi 0, %s317
      %s319 = sphi 0, %s317
      %s320 = sphi 0, %s319
      %s334 = sphi 0, %s320
      %s338 = sphi 0, %s338
      %s340 = sphi 0, %s338
      %s341 = sphi 0, %s340
      %s355 = sphi 0, %s341
      %s359 = sphi 0, %s359
      %s361 = sphi 0, %s359
      %s362 = sphi 0, %s361
      %s376 = sphi 0, %s362
      %s380 = sphi 0, %s380
      %s382 = sphi 0, %s380
      %s383 = sphi 0, %s382
      %s397 = sphi 0, %s383
      %s405 = sphi 0, %s407
      %s408 = sphi 0, %s405
      %s409 = sphi 0, %s408
      %s425 = sphi 0, %s409
    $region4: #{tpu_custom_call.1} parent=1 // loop_header_branch
      %36 = sbr.rel (%p34) target = $region8
    $region5: #{tpu_custom_call.1} parent=1 // loop_body
      %s38 = ssub.s32 %s33, 1
      %s39 = ssub.s32 %s33, 2
      %s46 = sadd.s32 1, %s41
      %p47 = scmp.ge.s32.totalorder %s46, 4
      %s48 = scalar_select %p47, 0, %s46
      %s49 = sadd.s32 1, %s40
      %s50 = scalar_select %p47, %s49, %s40
      %p51 = scmp.ge.s32.totalorder %s50, 2
      %s52 = scalar_select %p51, 0, %s50
      %s53 = ssub.s32 %s40, %s52
      %p54 = scmp.eq.s32.totalorder %s53, 0
      %s56 = sadd.s32 %s55, 1
      %s57 = scalar_select %p54, %s55, %s56
      %p60 = pneg %p54
      %p61 = scmp.eq.s32.totalorder %s33, 7
      %p62 = por %p60, %p61
      %p63 = scmp.ne.s32.totalorder %s55, %s58
      %p64 = scmp.eq.s32.totalorder %s33, 0
      %p65 = por %p63, %p64
      %p66 = scmp.ne.s32.totalorder %s55, %s58
      %p67 = scmp.eq.s32.totalorder %s38, 7
      %p68 = por %p66, %p67
      %p69 = scmp.ne.s32.totalorder %s58, %s59
      %p70 = scmp.eq.s32.totalorder %s38, 0
      %p71 = por %p69, %p70
      %p72 = scmp.ne.s32.totalorder %s58, %s59
      %p73 = scmp.eq.s32.totalorder %s39, 7
      %p74 = por %p72, %p73
      %p76 = scmp.ne.s32.totalorder %s59, %s75
      %p77 = scmp.eq.s32.totalorder %s39, 0
      %p78 = por %p76, %p77
      %s79 = ssub.s32 %s40, %s52
      %s80 = ssub.s32 %s41, %s48
      %s81 = sor.u32 %s79, %s80
      %p82 = scmp.eq.s32.totalorder %s81, 0
      %s84 = sadd.s32 %s83, 1
      %s85 = scalar_select %p82, %s83, %s84
      %p88 = pneg %p82
      %p89 = scmp.eq.s32.totalorder %s33, 7
      %p90 = por %p88, %p89
      %p91 = scmp.ne.s32.totalorder %s83, %s86
      %p92 = scmp.eq.s32.totalorder %s33, 0
      %p93 = por %p91, %p92
      %p94 = scmp.ne.s32.totalorder %s83, %s86
      %p95 = scmp.eq.s32.totalorder %s38, 7
      %p96 = por %p94, %p95
      %p97 = scmp.ne.s32.totalorder %s86, %s87
      %p98 = scmp.eq.s32.totalorder %s38, 0
      %p99 = por %p97, %p98
      %p100 = scmp.ne.s32.totalorder %s86, %s87
      %p101 = scmp.eq.s32.totalorder %s39, 7
      %p102 = por %p100, %p101
      %p104 = scmp.ne.s32.totalorder %s87, %s103
      %p105 = scmp.eq.s32.totalorder %s39, 0
      %p106 = por %p104, %p105
      %s108 = sadd.s32 %s107, 1
      %p111 = scmp.eq.s32.totalorder %s33, 7
      %p112 = scmp.ne.s32.totalorder %s107, %s109
      %p113 = scmp.eq.s32.totalorder %s33, 0
      %p114 = por %p112, %p113
      %p115 = scmp.ne.s32.totalorder %s107, %s109
      %p116 = scmp.eq.s32.totalorder %s38, 7
      %p117 = por %p115, %p116
      %p118 = scmp.ne.s32.totalorder %s109, %s110
      %p119 = scmp.eq.s32.totalorder %s38, 0
      %p120 = por %p118, %p119
      %p121 = scmp.ne.s32.totalorder %s109, %s110
      %p122 = scmp.eq.s32.totalorder %s39, 7
      %p123 = por %p121, %p122
      %p125 = scmp.ne.s32.totalorder %s110, %s124
      %p126 = scmp.eq.s32.totalorder %s39, 0
      %p127 = por %p125, %p126
      %s129 = sadd.s32 %s128, 1
      %p132 = scmp.eq.s32.totalorder %s33, 7
      %p133 = scmp.ne.s32.totalorder %s128, %s130
      %p134 = scmp.eq.s32.totalorder %s33, 0
      %p135 = por %p133, %p134
      %p136 = scmp.ne.s32.totalorder %s128, %s130
      %p137 = scmp.eq.s32.totalorder %s38, 7
      %p138 = por %p136, %p137
      %p139 = scmp.ne.s32.totalorder %s130, %s131
      %p140 = scmp.eq.s32.totalorder %s38, 0
      %p141 = por %p139, %p140
      %p142 = scmp.ne.s32.totalorder %s130, %s131
      %p143 = scmp.eq.s32.totalorder %s39, 7
      %p144 = por %p142, %p143
      %p146 = scmp.ne.s32.totalorder %s131, %s145
      %p147 = scmp.eq.s32.totalorder %s39, 0
      %p148 = por %p146, %p147
      %s150 = sadd.s32 %s149, 1
      %p153 = scmp.eq.s32.totalorder %s33, 7
      %p154 = scmp.ne.s32.totalorder %s149, %s151
      %p155 = scmp.eq.s32.totalorder %s33, 0
      %p156 = por %p154, %p155
      %p157 = scmp.ne.s32.totalorder %s149, %s151
      %p158 = scmp.eq.s32.totalorder %s38, 7
      %p159 = por %p157, %p158
      %p160 = scmp.ne.s32.totalorder %s151, %s152
      %p161 = scmp.eq.s32.totalorder %s38, 0
      %p162 = por %p160, %p161
      %p163 = scmp.ne.s32.totalorder %s151, %s152
      %p164 = scmp.eq.s32.totalorder %s39, 7
      %p165 = por %p163, %p164
      %p167 = scmp.ne.s32.totalorder %s152, %s166
      %p168 = scmp.eq.s32.totalorder %s39, 0
      %p169 = por %p167, %p168
      %s171 = sadd.s32 %s170, 1
      %p174 = scmp.eq.s32.totalorder %s33, 7
      %p175 = scmp.ne.s32.totalorder %s170, %s172
      %p176 = scmp.eq.s32.totalorder %s33, 0
      %p177 = por %p175, %p176
      %p178 = scmp.ne.s32.totalorder %s170, %s172
      %p179 = scmp.eq.s32.totalorder %s38, 7
      %p180 = por %p178, %p179
      %p181 = scmp.ne.s32.totalorder %s172, %s173
      %p182 = scmp.eq.s32.totalorder %s38, 0
      %p183 = por %p181, %p182
      %p184 = scmp.ne.s32.totalorder %s172, %s173
      %p185 = scmp.eq.s32.totalorder %s39, 7
      %p186 = por %p184, %p185
      %p188 = scmp.ne.s32.totalorder %s173, %s187
      %p189 = scmp.eq.s32.totalorder %s39, 0
      %p190 = por %p188, %p189
      %s192 = sadd.s32 %s191, 1
      %p195 = scmp.eq.s32.totalorder %s33, 7
      %p196 = scmp.ne.s32.totalorder %s191, %s193
      %p197 = scmp.eq.s32.totalorder %s33, 0
      %p198 = por %p196, %p197
      %p199 = scmp.ne.s32.totalorder %s191, %s193
      %p200 = scmp.eq.s32.totalorder %s38, 7
      %p201 = por %p199, %p200
      %p202 = scmp.ne.s32.totalorder %s193, %s194
      %p203 = scmp.eq.s32.totalorder %s38, 0
      %p204 = por %p202, %p203
      %p205 = scmp.ne.s32.totalorder %s193, %s194
      %p206 = scmp.eq.s32.totalorder %s39, 7
      %p207 = por %p205, %p206
      %p209 = scmp.ne.s32.totalorder %s194, %s208
      %p210 = scmp.eq.s32.totalorder %s39, 0
      %p211 = por %p209, %p210
      %s213 = sadd.s32 %s212, 1
      %p216 = scmp.eq.s32.totalorder %s33, 7
      %p217 = scmp.ne.s32.totalorder %s212, %s214
      %p218 = scmp.eq.s32.totalorder %s33, 0
      %p219 = por %p217, %p218
      %p220 = scmp.ne.s32.totalorder %s212, %s214
      %p221 = scmp.eq.s32.totalorder %s38, 7
      %p222 = por %p220, %p221
      %p223 = scmp.ne.s32.totalorder %s214, %s215
      %p224 = scmp.eq.s32.totalorder %s38, 0
      %p225 = por %p223, %p224
      %p226 = scmp.ne.s32.totalorder %s214, %s215
      %p227 = scmp.eq.s32.totalorder %s39, 7
      %p228 = por %p226, %p227
      %p230 = scmp.ne.s32.totalorder %s215, %s229
      %p231 = scmp.eq.s32.totalorder %s39, 0
      %p232 = por %p230, %p231
      %s234 = sadd.s32 %s233, 1
      %p237 = scmp.eq.s32.totalorder %s33, 7
      %p238 = scmp.ne.s32.totalorder %s233, %s235
      %p239 = scmp.eq.s32.totalorder %s33, 0
      %p240 = por %p238, %p239
      %p241 = scmp.ne.s32.totalorder %s233, %s235
      %p242 = scmp.eq.s32.totalorder %s38, 7
      %p243 = por %p241, %p242
      %p244 = scmp.ne.s32.totalorder %s235, %s236
      %p245 = scmp.eq.s32.totalorder %s38, 0
      %p246 = por %p244, %p245
      %p247 = scmp.ne.s32.totalorder %s235, %s236
      %p248 = scmp.eq.s32.totalorder %s39, 7
      %p249 = por %p247, %p248
      %p251 = scmp.ne.s32.totalorder %s236, %s250
      %p252 = scmp.eq.s32.totalorder %s39, 0
      %p253 = por %p251, %p252
      %s255 = sadd.s32 %s254, 1
      %p258 = scmp.eq.s32.totalorder %s33, 7
      %p259 = scmp.ne.s32.totalorder %s254, %s256
      %p260 = scmp.eq.s32.totalorder %s33, 0
      %p261 = por %p259, %p260
      %p262 = scmp.ne.s32.totalorder %s254, %s256
      %p263 = scmp.eq.s32.totalorder %s38, 7
      %p264 = por %p262, %p263
      %p265 = scmp.ne.s32.totalorder %s256, %s257
      %p266 = scmp.eq.s32.totalorder %s38, 0
      %p267 = por %p265, %p266
      %p268 = scmp.ne.s32.totalorder %s256, %s257
      %p269 = scmp.eq.s32.totalorder %s39, 7
      %p270 = por %p268, %p269
      %p272 = scmp.ne.s32.totalorder %s257, %s271
      %p273 = scmp.eq.s32.totalorder %s39, 0
      %p274 = por %p272, %p273
      %s276 = sadd.s32 %s275, 1
      %p279 = scmp.eq.s32.totalorder %s33, 7
      %p280 = scmp.ne.s32.totalorder %s275, %s277
      %p281 = scmp.eq.s32.totalorder %s33, 0
      %p282 = por %p280, %p281
      %p283 = scmp.ne.s32.totalorder %s275, %s277
      %p284 = scmp.eq.s32.totalorder %s38, 7
      %p285 = por %p283, %p284
      %p286 = scmp.ne.s32.totalorder %s277, %s278
      %p287 = scmp.eq.s32.totalorder %s38, 0
      %p288 = por %p286, %p287
      %p289 = scmp.ne.s32.totalorder %s277, %s278
      %p290 = scmp.eq.s32.totalorder %s39, 7
      %p291 = por %p289, %p290
      %p293 = scmp.ne.s32.totalorder %s278, %s292
      %p294 = scmp.eq.s32.totalorder %s39, 0
      %p295 = por %p293, %p294
      %s297 = sadd.s32 %s296, 1
      %p300 = scmp.eq.s32.totalorder %s33, 7
      %p301 = scmp.ne.s32.totalorder %s296, %s298
      %p302 = scmp.eq.s32.totalorder %s33, 0
      %p303 = por %p301, %p302
      %p304 = scmp.ne.s32.totalorder %s296, %s298
      %p305 = scmp.eq.s32.totalorder %s38, 7
      %p306 = por %p304, %p305
      %p307 = scmp.ne.s32.totalorder %s298, %s299
      %p308 = scmp.eq.s32.totalorder %s38, 0
      %p309 = por %p307, %p308
      %p310 = scmp.ne.s32.totalorder %s298, %s299
      %p311 = scmp.eq.s32.totalorder %s39, 7
      %p312 = por %p310, %p311
      %p314 = scmp.ne.s32.totalorder %s299, %s313
      %p315 = scmp.eq.s32.totalorder %s39, 0
      %p316 = por %p314, %p315
      %s318 = sadd.s32 %s317, 1
      %p321 = scmp.eq.s32.totalorder %s33, 7
      %p322 = scmp.ne.s32.totalorder %s317, %s319
      %p323 = scmp.eq.s32.totalorder %s33, 0
      %p324 = por %p322, %p323
      %p325 = scmp.ne.s32.totalorder %s317, %s319
      %p326 = scmp.eq.s32.totalorder %s38, 7
      %p327 = por %p325, %p326
      %p328 = scmp.ne.s32.totalorder %s319, %s320
      %p329 = scmp.eq.s32.totalorder %s38, 0
      %p330 = por %p328, %p329
      %p331 = scmp.ne.s32.totalorder %s319, %s320
      %p332 = scmp.eq.s32.totalorder %s39, 7
      %p333 = por %p331, %p332
      %p335 = scmp.ne.s32.totalorder %s320, %s334
      %p336 = scmp.eq.s32.totalorder %s39, 0
      %p337 = por %p335, %p336
      %s339 = sadd.s32 %s338, 1
      %p342 = scmp.eq.s32.totalorder %s33, 7
      %p343 = scmp.ne.s32.totalorder %s338, %s340
      %p344 = scmp.eq.s32.totalorder %s33, 0
      %p345 = por %p343, %p344
      %p346 = scmp.ne.s32.totalorder %s338, %s340
      %p347 = scmp.eq.s32.totalorder %s38, 7
      %p348 = por %p346, %p347
      %p349 = scmp.ne.s32.totalorder %s340, %s341
      %p350 = scmp.eq.s32.totalorder %s38, 0
      %p351 = por %p349, %p350
      %p352 = scmp.ne.s32.totalorder %s340, %s341
      %p353 = scmp.eq.s32.totalorder %s39, 7
      %p354 = por %p352, %p353
      %p356 = scmp.ne.s32.totalorder %s341, %s355
      %p357 = scmp.eq.s32.totalorder %s39, 0
      %p358 = por %p356, %p357
      %s360 = sadd.s32 %s359, 1
      %p363 = scmp.eq.s32.totalorder %s33, 7
      %p364 = scmp.ne.s32.totalorder %s359, %s361
      %p365 = scmp.eq.s32.totalorder %s33, 0
      %p366 = por %p364, %p365
      %p367 = scmp.ne.s32.totalorder %s359, %s361
      %p368 = scmp.eq.s32.totalorder %s38, 7
      %p369 = por %p367, %p368
      %p370 = scmp.ne.s32.totalorder %s361, %s362
      %p371 = scmp.eq.s32.totalorder %s38, 0
      %p372 = por %p370, %p371
      %p373 = scmp.ne.s32.totalorder %s361, %s362
      %p374 = scmp.eq.s32.totalorder %s39, 7
      %p375 = por %p373, %p374
      %p377 = scmp.ne.s32.totalorder %s362, %s376
      %p378 = scmp.eq.s32.totalorder %s39, 0
      %p379 = por %p377, %p378
      %s381 = sadd.s32 %s380, 1
      %p384 = scmp.eq.s32.totalorder %s33, 7
      %p385 = scmp.ne.s32.totalorder %s380, %s382
      %p386 = scmp.eq.s32.totalorder %s33, 0
      %p387 = por %p385, %p386
      %p388 = scmp.ne.s32.totalorder %s380, %s382
      %p389 = scmp.eq.s32.totalorder %s38, 7
      %p390 = por %p388, %p389
      %p391 = scmp.ne.s32.totalorder %s382, %s383
      %p392 = scmp.eq.s32.totalorder %s38, 0
      %p393 = por %p391, %p392
      %p394 = scmp.ne.s32.totalorder %s382, %s383
      %p395 = scmp.eq.s32.totalorder %s39, 7
      %p396 = por %p394, %p395
      %p398 = scmp.ne.s32.totalorder %s383, %s397
      %p399 = scmp.eq.s32.totalorder %s39, 0
      %p400 = por %p398, %p399
      %s401 = ssub.s32 %s40, %s52
      %s402 = ssub.s32 %s41, %s48
      %s403 = sor.u32 %s401, %s402
      %p404 = scmp.eq.s32.totalorder %s403, 0
      %s406 = sadd.s32 %s405, 1
      %s407 = scalar_select %p404, %s405, %s406
      %p410 = pneg %p404
      %p411 = scmp.eq.s32.totalorder %s33, 7
      %p412 = por %p410, %p411
      %p413 = scmp.ne.s32.totalorder %s405, %s408
      %p414 = scmp.eq.s32.totalorder %s33, 0
      %p415 = por %p413, %p414
      %p416 = scmp.ne.s32.totalorder %s405, %s408
      %p417 = scmp.eq.s32.totalorder %s38, 7
      %p418 = por %p416, %p417
      %p419 = scmp.ne.s32.totalorder %s408, %s409
      %p420 = scmp.eq.s32.totalorder %s38, 0
      %p421 = por %p419, %p420
      %p422 = scmp.ne.s32.totalorder %s408, %s409
      %p423 = scmp.eq.s32.totalorder %s39, 7
      %p424 = por %p422, %p423
      %p426 = scmp.ne.s32.totalorder %s409, %s425
      %p427 = scmp.eq.s32.totalorder %s39, 0
      %p428 = por %p426, %p427
      %p429 = scmp.le.s32.totalorder 1, %s33
      %p430 = scmp.lt.s32.totalorder %s33, 9
      %p431 = pnand %p429, %p430
      %p432 = pneg %p431
      // Predicated region
      $region9: #{tpu_custom_call.1} parent=5 // pred_check
        _
      $region10: #{tpu_custom_call.1} parent=5 // pred_check_branch
        %434 = sbr.rel (%p431) target = $region12
      $region11: #{tpu_custom_call.1} parent=5 // pred_region
        %s435 = ssub.s32 %s33, 1
        // Predicated region
        $region13: #{tpu_custom_call.1} parent=11 // pred_check
          %p436 = pneg %p120
        $region14: #{tpu_custom_call.1} parent=11 // pred_check_branch
          %438 = sbr.rel (%p436) target = $region16
        $region15: #{tpu_custom_call.1} parent=11 // pred_region
          %s440 = ssub.s32 1024, 1024
          %441 = vsyncadd [#allocation7], %s440
          %s442 = sshll.u32 [#allocation8], 4
          %s443 = int_to_ptr.vmem [resolvable:$true] %s442
          %448 = dma.hbm_to_vmem [thread:$0]  %s2, 1024, %s443, [#allocation7], 64, 64, 4
        $region16: #{tpu_custom_call.1} parent=11 // pred_fallthru
          _
        // Predicated region
        $region17: #{tpu_custom_call.1} parent=11 // pred_check
          %p449 = pneg %p141
        $region18: #{tpu_custom_call.1} parent=11 // pred_check_branch
          %451 = sbr.rel (%p449) target = $region20
        $region19: #{tpu_custom_call.1} parent=11 // pred_region
          _
        $region20: #{tpu_custom_call.1} parent=11 // pred_fallthru
          _
        // Predicated region
        $region21: #{tpu_custom_call.1} parent=11 // pred_check
          %p452 = pneg %p162
        $region22: #{tpu_custom_call.1} parent=11 // pred_check_branch
          %454 = sbr.rel (%p452) target = $region24
        $region23: #{tpu_custom_call.1} parent=11 // pred_region
          %s456 = ssub.s32 2048, 2048
          %457 = vsyncadd [#allocation10], %s456
          %s458 = sshll.u32 [#allocation9], 4
          %s459 = int_to_ptr.vmem [resolvable:$true] %s458
          %464 = dma.hbm_to_vmem [thread:$0]  %s4, 2048, %s459, [#allocation10], 128, 128, 8
        $region24: #{tpu_custom_call.1} parent=11 // pred_fallthru
          _
        // Predicated region
        $region25: #{tpu_custom_call.1} parent=11 // pred_check
          %p465 = pneg %p183
        $region26: #{tpu_custom_call.1} parent=11 // pred_check_branch
          %467 = sbr.rel (%p465) target = $region28
        $region27: #{tpu_custom_call.1} parent=11 // pred_region
          _
        $region28: #{tpu_custom_call.1} parent=11 // pred_fallthru
          _
        // Predicated region
        $region29: #{tpu_custom_call.1} parent=11 // pred_check
          %p468 = pneg %p204
        $region30: #{tpu_custom_call.1} parent=11 // pred_check_branch
          %470 = sbr.rel (%p468) target = $region32
        $region31: #{tpu_custom_call.1} parent=11 // pred_region
          %s472 = ssub.s32 1024, 1024
          %473 = vsyncadd [#allocation10], %s472
          %s474 = sshll.u32 [#allocation11], 4
          %s475 = int_to_ptr.vmem [resolvable:$true] %s474
          %480 = dma.hbm_to_vmem [thread:$0]  %s6, 1024, %s475, [#allocation10], 64, 64, 4
        $region32: #{tpu_custom_call.1} parent=11 // pred_fallthru
          _
        // Predicated region
        $region33: #{tpu_custom_call.1} parent=11 // pred_check
          %p481 = pneg %p225
        $region34: #{tpu_custom_call.1} parent=11 // pred_check_branch
          %483 = sbr.rel (%p481) target = $region36
        $region35: #{tpu_custom_call.1} parent=11 // pred_region
          _
        $region36: #{tpu_custom_call.1} parent=11 // pred_fallthru
          _
        // Predicated region
        $region37: #{tpu_custom_call.1} parent=11 // pred_check
          %p484 = pneg %p246
        $region38: #{tpu_custom_call.1} parent=11 // pred_check_branch
          %486 = sbr.rel (%p484) target = $region40
        $region39: #{tpu_custom_call.1} parent=11 // pred_region
          _
        $region40: #{tpu_custom_call.1} parent=11 // pred_fallthru
          _
        // Predicated region
        $region41: #{tpu_custom_call.1} parent=11 // pred_check
          %p487 = pneg %p267
        $region42: #{tpu_custom_call.1} parent=11 // pred_check_branch
          %489 = sbr.rel (%p487) target = $region44
        $region43: #{tpu_custom_call.1} parent=11 // pred_region
          _
        $region44: #{tpu_custom_call.1} parent=11 // pred_fallthru
          _
        // Predicated region
        $region45: #{tpu_custom_call.1} parent=11 // pred_check
          %p490 = pneg %p288
        $region46: #{tpu_custom_call.1} parent=11 // pred_check_branch
          %492 = sbr.rel (%p490) target = $region48
        $region47: #{tpu_custom_call.1} parent=11 // pred_region
          %s494 = ssub.s32 2048, 2048
          %495 = vsyncadd [#allocation13], %s494
          %s496 = sshll.u32 [#allocation12], 4
          %s497 = int_to_ptr.vmem [resolvable:$true] %s496
          %502 = dma.hbm_to_vmem [thread:$0]  %s10, 2048, %s497, [#allocation13], 128, 128, 8
        $region48: #{tpu_custom_call.1} parent=11 // pred_fallthru
          _
        // Predicated region
        $region49: #{tpu_custom_call.1} parent=11 // pred_check
          %p503 = pneg %p309
        $region50: #{tpu_custom_call.1} parent=11 // pred_check_branch
          %505 = sbr.rel (%p503) target = $region52
        $region51: #{tpu_custom_call.1} parent=11 // pred_region
          _
        $region52: #{tpu_custom_call.1} parent=11 // pred_fallthru
          _
        // Predicated region
        $region53: #{tpu_custom_call.1} parent=11 // pred_check
          %p506 = pneg %p330
        $region54: #{tpu_custom_call.1} parent=11 // pred_check_branch
          %508 = sbr.rel (%p506) target = $region56
        $region55: #{tpu_custom_call.1} parent=11 // pred_region
          %s510 = ssub.s32 2048, 2048
          %511 = vsyncadd [#allocation13], %s510
          %s512 = sshll.u32 [#allocation14], 4
          %s513 = int_to_ptr.vmem [resolvable:$true] %s512
          %518 = dma.hbm_to_vmem [thread:$0]  %s12, 2048, %s513, [#allocation13], 64, 64, 4
        $region56: #{tpu_custom_call.1} parent=11 // pred_fallthru
          _
        // Predicated region
        $region57: #{tpu_custom_call.1} parent=11 // pred_check
          %p519 = pneg %p351
        $region58: #{tpu_custom_call.1} parent=11 // pred_check_branch
          %521 = sbr.rel (%p519) target = $region60
        $region59: #{tpu_custom_call.1} parent=11 // pred_region
          _
        $region60: #{tpu_custom_call.1} parent=11 // pred_fallthru
          _
        // Predicated region
        $region61: #{tpu_custom_call.1} parent=11 // pred_check
          %p522 = pneg %p372
        $region62: #{tpu_custom_call.1} parent=11 // pred_check_branch
          %524 = sbr.rel (%p522) target = $region64
        $region63: #{tpu_custom_call.1} parent=11 // pred_region
          _
        $region64: #{tpu_custom_call.1} parent=11 // pred_fallthru
          _
        // Predicated region
        $region65: #{tpu_custom_call.1} parent=11 // pred_check
          %p525 = pneg %p393
        $region66: #{tpu_custom_call.1} parent=11 // pred_check_branch
          %527 = sbr.rel (%p525) target = $region68
        $region67: #{tpu_custom_call.1} parent=11 // pred_region
          _
        $region68: #{tpu_custom_call.1} parent=11 // pred_fallthru
          _
      $region12: #{tpu_custom_call.1} parent=5 // pred_fallthru
        _
      %p528 = scmp.lt.s32.totalorder %s33, 8
      // Predicated region
      $region69: #{tpu_custom_call.1} parent=5 // pred_check
        %p529 = pneg %p528
      $region70: #{tpu_custom_call.1} parent=5 // pred_check_branch
        %531 = sbr.rel (%p529) target = $region72
      $region71: #{tpu_custom_call.1} parent=5 // pred_region
        // Predicated region
        $region73: #{tpu_custom_call.1} parent=71 // pred_check
          %p532 = pneg %p65
        $region74: #{tpu_custom_call.1} parent=71 // pred_check_branch
          %534 = sbr.rel (%p532) target = $region76
        $region75: #{tpu_custom_call.1} parent=71 // pred_region
          %s535 = sand.u32 %s55, 1
          %s536 = scalar_lea.sflag [#allocation4], %s535
          %s537 = sand.u32 %s55, 1
          %s538 = smul.addr %s537, 64
          %s539 = scalar_lea.vmem [#allocation3], %s538
          %s541 = ssub.s32 1024, 1024
          %542 = vsyncadd %s536, %s541
          %s543 = smul.addr %s40, 8
          %s544 = smul.addr %s543, 128
          %s545 = scalar_lea.hbm %s0, %s544
          %s546 = sshll.u32 %s539, 4
          %s547 = int_to_ptr.vmem [resolvable:$true] %s546
          %552 = dma.hbm_to_vmem [thread:$0]  %s545, 1024, %s547, %s536, 128, 128, 8
        $region76: #{tpu_custom_call.1} parent=71 // pred_fallthru
          _
        // Predicated region
        $region77: #{tpu_custom_call.1} parent=71 // pred_check
          %p553 = pneg %p93
        $region78: #{tpu_custom_call.1} parent=71 // pred_check_branch
          %555 = sbr.rel (%p553) target = $region80
        $region79: #{tpu_custom_call.1} parent=71 // pred_region
          %s556 = sand.u32 %s33, 1
          %s557 = scalar_lea.sflag [#allocation7], %s556
          %s558 = sand.u32 %s83, 1
          %s559 = scalar_lea.vmem [#allocation6], %s558
          %s561 = ssub.s32 16, 16
          %562 = vsyncadd %s557, %s561
          %s563 = smul.addr %s40, 4
          %s564 = sadd.s32 %s41, %s563
          %s565 = smul.addr %s564, 16
          %s566 = scalar_lea.hbm %s1, %s565
          %s568 = sshll.u32 %s559, 4
          %s569 = int_to_ptr.vmem [resolvable:$true] %s568
          %571 = dma.hbm_to_vmem [thread:$0]  %s566, 16, %s569, %s557
        $region80: #{tpu_custom_call.1} parent=71 // pred_fallthru
          _
      $region72: #{tpu_custom_call.1} parent=5 // pred_fallthru
        _
      %p572 = scmp.le.s32.totalorder 1, %s33
      %p573 = scmp.lt.s32.totalorder %s33, 9
      %p574 = pnand %p572, %p573
      %p575 = pneg %p574
      // Predicated region
      $region81: #{tpu_custom_call.1} parent=5 // pred_check
        _
      $region82: #{tpu_custom_call.1} parent=5 // pred_check_branch
        %577 = sbr.rel (%p574) target = $region84
      $region83: #{tpu_custom_call.1} parent=5 // pred_region
        %s578 = ssub.s32 %s33, 1
        %s579 = sand.u32 %s58, 1
        %s580 = scalar_lea.sflag [#allocation4], %s579
        %s581 = sand.u32 %s58, 1
        %s582 = smul.addr %s581, 64
        %s583 = scalar_lea.vmem [#allocation3], %s582
        // Predicated region
        $region85: #{tpu_custom_call.1} parent=83 // pred_check
          %p584 = pneg %p71
        $region86: #{tpu_custom_call.1} parent=83 // pred_check_branch
          %586 = sbr.rel (%p584) target = $region88
        $region87: #{tpu_custom_call.1} parent=83 // pred_region
          %587 = dma.done %s580, 1024
        $region88: #{tpu_custom_call.1} parent=83 // pred_fallthru
          _
        %s588 = sand.u32 %s38, 1
        %s589 = scalar_lea.sflag [#allocation7], %s588
        %s590 = sand.u32 %s86, 1
        %s591 = scalar_lea.vmem [#allocation6], %s590
        // Predicated region
        $region89: #{tpu_custom_call.1} parent=83 // pred_check
          %p592 = pneg %p99
        $region90: #{tpu_custom_call.1} parent=83 // pred_check_branch
          %594 = sbr.rel (%p592) target = $region92
        $region91: #{tpu_custom_call.1} parent=83 // pred_region
          %595 = dma.done %s589, 16
        $region92: #{tpu_custom_call.1} parent=83 // pred_fallthru
          _
        // Predicated region
        $region93: #{tpu_custom_call.1} parent=83 // pred_check
          %p596 = pneg %p120
        $region94: #{tpu_custom_call.1} parent=83 // pred_check_branch
          %598 = sbr.rel (%p596) target = $region96
        $region95: #{tpu_custom_call.1} parent=83 // pred_region
          %599 = dma.done [#allocation7], 1024
        $region96: #{tpu_custom_call.1} parent=83 // pred_fallthru
          _
        // Predicated region
        $region97: #{tpu_custom_call.1} parent=83 // pred_check
          %p600 = pneg %p162
        $region98: #{tpu_custom_call.1} parent=83 // pred_check_branch
          %602 = sbr.rel (%p600) target = $region100
        $region99: #{tpu_custom_call.1} parent=83 // pred_region
          %603 = dma.done [#allocation10], 2048
        $region100: #{tpu_custom_call.1} parent=83 // pred_fallthru
          _
        // Predicated region
        $region101: #{tpu_custom_call.1} parent=83 // pred_check
          %p604 = pneg %p204
        $region102: #{tpu_custom_call.1} parent=83 // pred_check_branch
          %606 = sbr.rel (%p604) target = $region104
        $region103: #{tpu_custom_call.1} parent=83 // pred_region
          %607 = dma.done [#allocation10], 1024
        $region104: #{tpu_custom_call.1} parent=83 // pred_fallthru
          _
        // Predicated region
        $region105: #{tpu_custom_call.1} parent=83 // pred_check
          %p608 = pneg %p288
        $region106: #{tpu_custom_call.1} parent=83 // pred_check_branch
          %610 = sbr.rel (%p608) target = $region108
        $region107: #{tpu_custom_call.1} parent=83 // pred_region
          %611 = dma.done [#allocation13], 2048
        $region108: #{tpu_custom_call.1} parent=83 // pred_fallthru
          _
        // Predicated region
        $region109: #{tpu_custom_call.1} parent=83 // pred_check
          %p612 = pneg %p330
        $region110: #{tpu_custom_call.1} parent=83 // pred_check_branch
          %614 = sbr.rel (%p612) target = $region112
        $region111: #{tpu_custom_call.1} parent=83 // pred_region
          %615 = dma.done [#allocation13], 2048
        $region112: #{tpu_custom_call.1} parent=83 // pred_fallthru
          _
        %s616 = sand.u32 %s58, 1
        %s617 = scalar_lea.sflag [#allocation4], %s616
        %s618 = sand.u32 %s58, 1
        %s619 = smul.addr %s618, 64
        %s620 = scalar_lea.vmem [#allocation3], %s619
        %p621 = pneg %p71
        %p622 = pneg %p68
        %s623 = sand.u32 %s38, 1
        %s624 = scalar_lea.sflag [#allocation7], %s623
        %s625 = sand.u32 %s86, 1
        %s626 = scalar_lea.vmem [#allocation6], %s625
        %p627 = pneg %p99
        %p628 = pneg %p96
        %p629 = pneg %p120
        %p630 = pneg %p117
        %p631 = pneg %p141
        %p632 = pneg %p138
        %p633 = pneg %p162
        %p634 = pneg %p159
        %p635 = pneg %p183
        %p636 = pneg %p180
        %p637 = pneg %p204
        %p638 = pneg %p201
        %p639 = pneg %p225
        %p640 = pneg %p222
        %p641 = pneg %p246
        %p642 = pneg %p243
        %p643 = pneg %p267
        %p644 = pneg %p264
        %p645 = pneg %p288
        %p646 = pneg %p285
        %p647 = pneg %p309
        %p648 = pneg %p306
        %p649 = pneg %p330
        %p650 = pneg %p327
        %p651 = pneg %p351
        %p652 = pneg %p348
        %p653 = pneg %p372
        %p654 = pneg %p369
        %p655 = pneg %p393
        %p656 = pneg %p390
        %p657 = pneg %p421
        %p658 = pneg %p418
        %s659 = sand.u32 %s408, 1
        %s660 = scalar_lea.sflag [#allocation5], %s659
        %s661 = sand.u32 %s408, 1
        %s662 = smul.addr %s661, 16
        %s663 = scalar_lea.vmem [#allocation15], %s662
        %s664 = smul.u32 2, %s43
        %s666 = smul.u32 %s43, 16
        %s667 = ssub.s32 %s666, 8
        %p668 = scmp.gt.s32.totalorder %s667, 0
        %s669 = scalar_select %p668, %s667, 0
        %p670 = scmp.lt.s32.totalorder %s669, 32
        %s671 = scalar_select %p670, %s669, 32
        %s672 = scalar_lea.vmem %s583, %s666 [#allocation3]
        %v673 = vld [vmem:[%s672] sm:$0xff]
        %v674 = vld [vmem:[%s672 + $0x8] sm:$0xff]
        %s675 = scalar_lea.vmem %s583, %s671 [#allocation3]
        %v676 = vld [vmem:[%s675] sm:$0xff]
        %v677 = vld [vmem:[%s675 + $0x8] sm:$0xff]
        %v678 = vld [vmem:[%s675 + $0x10] sm:$0xff]
        %v679 = vld [vmem:[%s675 + $0x18] sm:$0xff]
        %v680 = vpack.c.bf16 %v674, %v673
        %v681 = vld [vmem:[#allocation8] sm:$0xf]
        %v682 = vld [vmem:[#allocation8 + $0x4] sm:$0xf]
        %v683 = vld [vmem:[#allocation8 + $0x8] sm:$0xf]
        %v684 = vld [vmem:[#allocation8 + $0xc] sm:$0xf]
        %v685 = vld [vmem:[#allocation8 + $0x10] sm:$0xf]
        %v686 = vld [vmem:[#allocation8 + $0x14] sm:$0xf]
        %v687 = vld [vmem:[#allocation8 + $0x18] sm:$0xf]
        %v688 = vld [vmem:[#allocation8 + $0x1c] sm:$0xf]
        %v689 = vld [vmem:[#allocation8 + $0x20] sm:$0xf]
        %v690 = vld [vmem:[#allocation8 + $0x24] sm:$0xf]
        %v691 = vld [vmem:[#allocation8 + $0x28] sm:$0xf]
        %v692 = vld [vmem:[#allocation8 + $0x2c] sm:$0xf]
        %v693 = vld [vmem:[#allocation8 + $0x30] sm:$0xf]
        %v694 = vld [vmem:[#allocation8 + $0x34] sm:$0xf]
        %v695 = vld [vmem:[#allocation8 + $0x38] sm:$0xf]
        %v696 = vld [vmem:[#allocation8 + $0x3c] sm:$0xf]
        %v697 = vld [vmem:[%s3] sm:$0x1]
        %v699 = vlaneseq
        %v700 = vshrl.u32 %v699, 7
        %v701 = vsub.s32 0, %v700
        %v702 = vrot.slane %v697, %v701
        %v720 = vunpack.c.l.b16 %v681
        %v721 = vunpack.c.l.b16 %v682
        %v722 = vunpack.c.l.b16 %v683
        %v723 = vunpack.c.l.b16 %v684
        %v724 = vunpack.c.l.b16 %v685
        %v725 = vunpack.c.l.b16 %v686
        %v726 = vunpack.c.l.b16 %v687
        %v727 = vunpack.c.l.b16 %v688
        %v728 = vunpack.c.l.b16 %v689
        %v729 = vunpack.c.l.b16 %v690
        %v730 = vunpack.c.l.b16 %v691
        %v731 = vunpack.c.l.b16 %v692
        %v732 = vunpack.c.l.b16 %v693
        %v733 = vunpack.c.l.b16 %v694
        %v734 = vunpack.c.l.b16 %v695
        %v735 = vunpack.c.l.b16 %v696
        %v736 = vpack.c.b16 %v721, %v720
        %v737 = vpack.c.b16 %v723, %v722
        %v738 = vpack.c.b16 %v725, %v724
        %v739 = vpack.c.b16 %v727, %v726
        %v740 = vpack.c.b16 %v729, %v728
        %v741 = vpack.c.b16 %v731, %v730
        %v742 = vpack.c.b16 %v733, %v732
        %v743 = vpack.c.b16 %v735, %v734
        %752 = vmatprep.subr.bf16.mxu0 0
        %753 = vmatpush1.bf16.msra.mxu0 %v743
        %754 = vmatprep.subr.bf16.mxu0 0
        %755 = vmatpush1.bf16.msra.mxu0 %v742
        %756 = vmatprep.subr.bf16.mxu0 0
        %757 = vmatpush1.bf16.msra.mxu0 %v741
        %758 = vmatprep.subr.bf16.mxu0 0
        %759 = vmatpush1.bf16.msra.mxu0 %v740
        %760 = vmatprep.subr.bf16.mxu0 0
        %761 = vmatpush1.bf16.msra.mxu0 %v739
        %762 = vmatprep.subr.bf16.mxu0 0
        %763 = vmatpush1.bf16.msra.mxu0 %v738
        %764 = vmatprep.subr.bf16.mxu0 0
        %765 = vmatpush1.bf16.msra.mxu0 %v737
        %766 = vmatprep.subr.bf16.mxu0 0
        %767 = vmatpush1.bf16.msra.mxu0 %v736
        %768 = vmatprep.subr.bf16.mxu0 0
        %769 = vmatpush2.bf16.msra.mxu0 0
        %770 = vmatprep.subr.bf16.mxu0 0
        %771 = vmatpush2.bf16.msra.mxu0 0
        %772 = vmatprep.subr.bf16.mxu0 0
        %773 = vmatpush2.bf16.msra.mxu0 0
        %774 = vmatprep.subr.bf16.mxu0 0
        %775 = vmatpush2.bf16.msra.mxu0 0
        %776 = vmatprep.subr.bf16.mxu0 0
        %777 = vmatpush2.bf16.msra.mxu0 0
        %778 = vmatprep.subr.bf16.mxu0 0
        %779 = vmatpush2.bf16.msra.mxu0 0
        %780 = vmatprep.subr.bf16.mxu0 0
        %781 = vmatpush2.bf16.msra.mxu0 0
        %782 = vmatprep.subr.bf16.mxu0 0
        %783 = vmatpush2.bf16.msra.mxu0 0
        %784 = vmatprep.mubr.bf16.mxu0 0
        %785 = vmatmul.mubr.bf16.gmra.mxu0 %v680
        %v786 = vpop.f32.mrf.mxu0
        %v787 = vadd.f32 %v702, %v786
        %v788 = vpop.f32.mrf.mxu0
        %v789 = vpop.f32.mrf.mxu0
        %v790 = vadd.f32 %v702, %v789
        %v791 = vpop.f32.mrf.mxu0
        %792 = vdwg.mxu0
        %v793 = vpack.c.bf16 %v677, %v676
        %v794 = vpack.c.bf16 %v679, %v678
        %v795 = vld [vmem:[#allocation9] sm:$0xff]
        %v796 = vld [vmem:[#allocation9 + $0x8] sm:$0xff]
        %v797 = vld [vmem:[#allocation9 + $0x10] sm:$0xff]
        %v798 = vld [vmem:[#allocation9 + $0x18] sm:$0xff]
        %v799 = vld [vmem:[#allocation9 + $0x20] sm:$0xff]
        %v800 = vld [vmem:[#allocation9 + $0x28] sm:$0xff]
        %v801 = vld [vmem:[#allocation9 + $0x30] sm:$0xff]
        %v802 = vld [vmem:[#allocation9 + $0x38] sm:$0xff]
        %v803 = vld [vmem:[#allocation9 + $0x40] sm:$0xff]
        %v804 = vld [vmem:[#allocation9 + $0x48] sm:$0xff]
        %v805 = vld [vmem:[#allocation9 + $0x50] sm:$0xff]
        %v806 = vld [vmem:[#allocation9 + $0x58] sm:$0xff]
        %v807 = vld [vmem:[#allocation9 + $0x60] sm:$0xff]
        %v808 = vld [vmem:[#allocation9 + $0x68] sm:$0xff]
        %v809 = vld [vmem:[#allocation9 + $0x70] sm:$0xff]
        %v810 = vld [vmem:[#allocation9 + $0x78] sm:$0xff]
        %v811 = vld [vmem:[%s5] sm:$0x3]
        %v813 = vlaneseq
        %v814 = vshrl.u32 %v813, 7
        %v815 = vsub.s32 0, %v814
        %v816 = vrot.slane %v811, %v815
        %v817 = vlaneseq
        %v818 = vshrl.u32 %v817, 7
        %v819 = vsub.s32 1, %v818
        %v820 = vrot.slane %v811, %v819
        %v839 = vunpack.c.l.b16 %v795
        %v840 = vunpack.c.h.b16 %v795
        %v841 = vunpack.c.l.b16 %v796
        %v842 = vunpack.c.h.b16 %v796
        %v843 = vunpack.c.l.b16 %v797
        %v844 = vunpack.c.h.b16 %v797
        %v845 = vunpack.c.l.b16 %v798
        %v846 = vunpack.c.h.b16 %v798
        %v847 = vunpack.c.l.b16 %v799
        %v848 = vunpack.c.h.b16 %v799
        %v849 = vunpack.c.l.b16 %v800
        %v850 = vunpack.c.h.b16 %v800
        %v851 = vunpack.c.l.b16 %v801
        %v852 = vunpack.c.h.b16 %v801
        %v853 = vunpack.c.l.b16 %v802
        %v854 = vunpack.c.h.b16 %v802
        %v855 = vunpack.c.l.b16 %v803
        %v856 = vunpack.c.h.b16 %v803
        %v857 = vunpack.c.l.b16 %v804
        %v858 = vunpack.c.h.b16 %v804
        %v859 = vunpack.c.l.b16 %v805
        %v860 = vunpack.c.h.b16 %v805
        %v861 = vunpack.c.l.b16 %v806
        %v862 = vunpack.c.h.b16 %v806
        %v863 = vunpack.c.l.b16 %v807
        %v864 = vunpack.c.h.b16 %v807
        %v865 = vunpack.c.l.b16 %v808
        %v866 = vunpack.c.h.b16 %v808
        %v867 = vunpack.c.l.b16 %v809
        %v868 = vunpack.c.h.b16 %v809
        %v869 = vunpack.c.l.b16 %v810
        %v870 = vunpack.c.h.b16 %v810
        %v871 = vpack.c.b16 %v841, %v839
        %v872 = vpack.c.b16 %v842, %v840
        %v873 = vpack.c.b16 %v845, %v843
        %v874 = vpack.c.b16 %v846, %v844
        %v875 = vpack.c.b16 %v849, %v847
        %v876 = vpack.c.b16 %v850, %v848
        %v877 = vpack.c.b16 %v853, %v851
        %v878 = vpack.c.b16 %v854, %v852
        %v879 = vpack.c.b16 %v857, %v855
        %v880 = vpack.c.b16 %v858, %v856
        %v881 = vpack.c.b16 %v861, %v859
        %v882 = vpack.c.b16 %v862, %v860
        %v883 = vpack.c.b16 %v865, %v863
        %v884 = vpack.c.b16 %v866, %v864
        %v885 = vpack.c.b16 %v869, %v867
        %v886 = vpack.c.b16 %v870, %v868
        %903 = vmatprep.subr.bf16.mxu0 %v886
        %904 = vmatpush1.bf16.msra.mxu0 %v885
        %905 = vmatprep.subr.bf16.mxu0 %v884
        %906 = vmatpush1.bf16.msra.mxu0 %v883
        %907 = vmatprep.subr.bf16.mxu0 %v882
        %908 = vmatpush1.bf16.msra.mxu0 %v881
        %909 = vmatprep.subr.bf16.mxu0 %v880
        %910 = vmatpush1.bf16.msra.mxu0 %v879
        %911 = vmatprep.subr.bf16.mxu0 %v878
        %912 = vmatpush1.bf16.msra.mxu0 %v877
        %913 = vmatprep.subr.bf16.mxu0 %v876
        %914 = vmatpush1.bf16.msra.mxu0 %v875
        %915 = vmatprep.subr.bf16.mxu0 %v874
        %916 = vmatpush1.bf16.msra.mxu0 %v873
        %917 = vmatprep.subr.bf16.mxu0 %v872
        %918 = vmatpush1.bf16.msra.mxu0 %v871
        %919 = vmatprep.subr.bf16.mxu0 0
        %920 = vmatpush2.bf16.msra.mxu0 0
        %921 = vmatprep.subr.bf16.mxu0 0
        %922 = vmatpush2.bf16.msra.mxu0 0
        %923 = vmatprep.subr.bf16.mxu0 0
        %924 = vmatpush2.bf16.msra.mxu0 0
        %925 = vmatprep.subr.bf16.mxu0 0
        %926 = vmatpush2.bf16.msra.mxu0 0
        %927 = vmatprep.subr.bf16.mxu0 0
        %928 = vmatpush2.bf16.msra.mxu0 0
        %929 = vmatprep.subr.bf16.mxu0 0
        %930 = vmatpush2.bf16.msra.mxu0 0
        %931 = vmatprep.subr.bf16.mxu0 0
        %932 = vmatpush2.bf16.msra.mxu0 0
        %933 = vmatprep.subr.bf16.mxu0 0
        %934 = vmatpush2.bf16.msra.mxu0 0
        %935 = vmatprep.mubr.bf16.mxu0 0
        %936 = vmatmul.mubr.bf16.gmra.mxu0 %v793
        %v937 = vpop.f32.mrf.mxu0
        %v938 = vadd.f32 %v816, %v937
        %v939 = vpop.f32.mrf.mxu0
        %v940 = vadd.f32 %v820, %v939
        %v941 = vpop.f32.mrf.mxu0
        %v942 = vadd.f32 %v816, %v941
        %v943 = vpop.f32.mrf.mxu0
        %v944 = vadd.f32 %v820, %v943
        %945 = vmatprep.mubr.bf16.mxu0 0
        %946 = vmatmul.mubr.bf16.gmra.mxu0 %v794
        %v947 = vpop.f32.mrf.mxu0
        %v948 = vadd.f32 %v816, %v947
        %v949 = vpop.f32.mrf.mxu0
        %v950 = vadd.f32 %v820, %v949
        %v951 = vpop.f32.mrf.mxu0
        %v952 = vadd.f32 %v816, %v951
        %v953 = vpop.f32.mrf.mxu0
        %v954 = vadd.f32 %v820, %v953
        %955 = vdwg.mxu0
        %v956 = vmul.f32 %v787, 0.17677669
        %v957 = vmul.f32 %v790, 0.17677669
        %v958 = vpack.c.bf16 %v957, %v956
        %v959 = vpack.c.bf16 %v942, %v938
        %v960 = vpack.c.bf16 %v952, %v948
        %v961 = vpack.c.bf16 %v944, %v940
        %v962 = vpack.c.bf16 %v954, %v950
        %v963 = vlaneseq
        %v964 = vshrl.u32 %v963, 7
        %v965 = vadd.s32 %v964, 8
        %v966 = vstv %s666
        %v967 = vadd.s32 %v966, %v964
        %v968 = vadd.s32 %v966, %v965
        %v969 = vlaneseq
        %v970 = vand.u32 %v969, 127
        %v971 = vstv %s671
        %v972 = vadd.s32 %v971, %v970
        %v973 = vsub.s32 %v967, %v972
        %v974 = vsub.s32 %v968, %v972
        %vm975 = vcmp.lt.s32.totalorder %v973, 0
        %v976 = vsub.s32 0, %v973
        %v977 = vsel %vm975, %v976, %v973
        %vm978 = vcmp.lt.s32.totalorder %v974, 0
        %v979 = vsub.s32 0, %v974
        %v980 = vsel %vm978, %v979, %v974
        %vm981 = vcmp.le.s32.totalorder %v977, 4
        %vm982 = vcmp.le.s32.totalorder %v980, 4
        %v983 = vsel %vm981, 0.0, -9e+15
        %v984 = vsel %vm982, 0.0, -9e+15
        %v985 = vld [vmem:[%s591] sm:$0x1]
        %v987 = vlaneseq
        %v988 = vshrl.u32 %v987, 7
        %v989 = vsub.s32 0, %v988
        %v990 = vrot.slane %v985, %v989
        %v992 = vadd.f32 %v983, %v990
        %v993 = vadd.f32 %v984, %v990
        %vm994 = vcmask 261120
        %v996 = vsel %vm994, %v958, 0
        %v999 = vsel %vm994, %v959, 0
        %v1002 = vsel %vm994, %v960, 0
        %1004 = vmatprep.subr.bf16.mxu0 0
        %1005 = vmatpush1.bf16.xpose.msra.mxu0 0
        %1006 = vmatprep.subr.bf16.mxu0 0
        %1007 = vmatpush1.bf16.xpose.msra.mxu0 0
        %1008 = vmatprep.subr.bf16.mxu0 0
        %1009 = vmatpush1.bf16.xpose.msra.mxu0 0
        %1010 = vmatprep.subr.bf16.mxu0 0
        %1011 = vmatpush1.bf16.xpose.msra.mxu0 0
        %1012 = vmatprep.subr.bf16.mxu0 0
        %1013 = vmatpush1.bf16.xpose.msra.mxu0 0
        %1014 = vmatprep.subr.bf16.mxu0 0
        %1015 = vmatpush1.bf16.xpose.msra.mxu0 0
        %1016 = vmatprep.subr.bf16.mxu0 0
        %1017 = vmatpush1.bf16.xpose.msra.mxu0 %v1002
        %1018 = vmatprep.subr.bf16.mxu0 0
        %1019 = vmatpush1.bf16.xpose.msra.mxu0 %v999
        %1020 = vmatprep.subr.bf16.mxu0 0
        %1021 = vmatpush2.bf16.xpose.msra.mxu0 0
        %1022 = vmatprep.subr.bf16.mxu0 0
        %1023 = vmatpush2.bf16.xpose.msra.mxu0 0
        %1024 = vmatprep.subr.bf16.mxu0 0
        %1025 = vmatpush2.bf16.xpose.msra.mxu0 0
        %1026 = vmatprep.subr.bf16.mxu0 0
        %1027 = vmatpush2.bf16.xpose.msra.mxu0 0
        %1028 = vmatprep.subr.bf16.mxu0 0
        %1029 = vmatpush2.bf16.xpose.msra.mxu0 0
        %1030 = vmatprep.subr.bf16.mxu0 0
        %1031 = vmatpush2.bf16.xpose.msra.mxu0 0
        %1032 = vmatprep.subr.bf16.mxu0 0
        %1033 = vmatpush2.bf16.xpose.msra.mxu0 0
        %1034 = vmatprep.subr.bf16.mxu0 0
        %1035 = vmatpush2.bf16.xpose.msra.mxu0 0
        %1036 = vmatprep.mubr.bf16.mxu0 0
        %1037 = vmatmul.mubr.bf16.gmra.mxu0 %v996
        %v1038 = vpop.f32.mrf.mxu0
        %v1039 = vadd.f32 %v992, %v1038
        %v1040 = vpop.f32.mrf.mxu0
        %v1041 = vpop.f32.mrf.mxu0
        %v1042 = vadd.f32 %v993, %v1041
        %v1043 = vpop.f32.mrf.mxu0
        %1044 = vdwg.mxu0
        %v1045 = vsel %vm994, %v1039, -inf
        %1046 = vmax.xlane.f32.xlu0 %v1045
        %v1047 = vpop.xlane.xlu0 %1046
        %v1048 = vsel %vm994, %v1042, -inf
        %1049 = vmax.xlane.f32.xlu0 %v1048
        %v1050 = vpop.xlane.xlu0 %1049
        %v1051 = vsub.f32 %v1039, %v1047
        %v1052 = vsub.f32 %v1042, %v1050
        %v1053 = vmul.f32 %v1051, 1.442695
        %v1054 = vpow.pop %v1053
        %v1055 = vmul.f32 %v1052, 1.442695
        %v1056 = vpow.pop %v1055
        %v1057 = vsel %vm994, %v1054, 0.0
        %1058 = vadd.xlane.f32.xlu0 %v1057
        %v1059 = vpop.xlane.xlu0 %1058
        %v1060 = vsel %vm994, %v1056, 0.0
        %1061 = vadd.xlane.f32.xlu0 %v1060
        %v1062 = vpop.xlane.xlu0 %1061
        %v1063 = vrcp.pop %v1059
        %v1064 = vmul.f32 %v1054, %v1063
        %v1065 = vrcp.pop %v1062
        %v1066 = vmul.f32 %v1056, %v1065
        %v1067 = vpack.c.bf16 %v1066, %v1064
        %v1069 = vsel %vm994, %v1067, 0
        %1071 = vmatprep.subr.bf16.mxu0 0
        %1072 = vmatpush1.bf16.msra.mxu0 0
        %1073 = vmatprep.subr.bf16.mxu0 0
        %1074 = vmatpush1.bf16.msra.mxu0 0
        %1075 = vmatprep.subr.bf16.mxu0 0
        %1076 = vmatpush1.bf16.msra.mxu0 0
        %1077 = vmatprep.subr.bf16.mxu0 0
        %1078 = vmatpush1.bf16.msra.mxu0 0
        %1079 = vmatprep.subr.bf16.mxu0 0
        %1080 = vmatpush1.bf16.msra.mxu0 0
        %1081 = vmatprep.subr.bf16.mxu0 0
        %1082 = vmatpush1.bf16.msra.mxu0 0
        %1083 = vmatprep.subr.bf16.mxu0 0
        %1084 = vmatpush1.bf16.msra.mxu0 %v962
        %1085 = vmatprep.subr.bf16.mxu0 0
        %1086 = vmatpush1.bf16.msra.mxu0 %v961
        %1087 = vmatprep.subr.bf16.mxu0 0
        %1088 = vmatpush2.bf16.msra.mxu0 0
        %1089 = vmatprep.subr.bf16.mxu0 0
        %1090 = vmatpush2.bf16.msra.mxu0 0
        %1091 = vmatprep.subr.bf16.mxu0 0
        %1092 = vmatpush2.bf16.msra.mxu0 0
        %1093 = vmatprep.subr.bf16.mxu0 0
        %1094 = vmatpush2.bf16.msra.mxu0 0
        %1095 = vmatprep.subr.bf16.mxu0 0
        %1096 = vmatpush2.bf16.msra.mxu0 0
        %1097 = vmatprep.subr.bf16.mxu0 0
        %1098 = vmatpush2.bf16.msra.mxu0 0
        %1099 = vmatprep.subr.bf16.mxu0 0
        %1100 = vmatpush2.bf16.msra.mxu0 0
        %1101 = vmatprep.subr.bf16.mxu0 0
        %1102 = vmatpush2.bf16.msra.mxu0 0
        %1103 = vmatprep.mubr.bf16.mxu0 0
        %1104 = vmatmul.mubr.bf16.gmra.mxu0 %v1069
        %v1105 = vpop.f32.mrf.mxu0
        %v1106 = vadd.f32 0.0, %v1105
        %v1107 = vpop.f32.mrf.mxu0
        %v1108 = vpop.f32.mrf.mxu0
        %v1109 = vadd.f32 0.0, %v1108
        %v1110 = vpop.f32.mrf.mxu0
        %1111 = vdwg.mxu0
        %1112 = vst.msk [vmem:[#allocation2] sm:$0xff] %vm994, %v1106
        %1113 = vst.msk [vmem:[#allocation2 + $0x8] sm:$0xff] %vm994, %v1109
        %1115 = vrot.lane.b32.xlu0 %v958, 96
        %v1116 = vpop.permute.xlu0 %1115
        %1119 = vrot.lane.b32.xlu0 %v959, 96
        %v1120 = vpop.permute.xlu0 %1119
        %1121 = vrot.lane.b32.xlu0 %v960, 96
        %v1122 = vpop.permute.xlu0 %1121
        %v1124 = vsel %vm994, %v1116, 0
        %v1127 = vsel %vm994, %v1120, 0
        %v1130 = vsel %vm994, %v1122, 0
        %1132 = vmatprep.subr.bf16.mxu0 0
        %1133 = vmatpush1.bf16.xpose.msra.mxu0 0
        %1134 = vmatprep.subr.bf16.mxu0 0
        %1135 = vmatpush1.bf16.xpose.msra.mxu0 0
        %1136 = vmatprep.subr.bf16.mxu0 0
        %1137 = vmatpush1.bf16.xpose.msra.mxu0 0
        %1138 = vmatprep.subr.bf16.mxu0 0
        %1139 = vmatpush1.bf16.xpose.msra.mxu0 0
        %1140 = vmatprep.subr.bf16.mxu0 0
        %1141 = vmatpush1.bf16.xpose.msra.mxu0 0
        %1142 = vmatprep.subr.bf16.mxu0 0
        %1143 = vmatpush1.bf16.xpose.msra.mxu0 0
        %1144 = vmatprep.subr.bf16.mxu0 0
        %1145 = vmatpush1.bf16.xpose.msra.mxu0 %v1130
        %1146 = vmatprep.subr.bf16.mxu0 0
        %1147 = vmatpush1.bf16.xpose.msra.mxu0 %v1127
        %1148 = vmatprep.subr.bf16.mxu0 0
        %1149 = vmatpush2.bf16.xpose.msra.mxu0 0
        %1150 = vmatprep.subr.bf16.mxu0 0
        %1151 = vmatpush2.bf16.xpose.msra.mxu0 0
        %1152 = vmatprep.subr.bf16.mxu0 0
        %1153 = vmatpush2.bf16.xpose.msra.mxu0 0
        %1154 = vmatprep.subr.bf16.mxu0 0
        %1155 = vmatpush2.bf16.xpose.msra.mxu0 0
        %1156 = vmatprep.subr.bf16.mxu0 0
        %1157 = vmatpush2.bf16.xpose.msra.mxu0 0
        %1158 = vmatprep.subr.bf16.mxu0 0
        %1159 = vmatpush2.bf16.xpose.msra.mxu0 0
        %1160 = vmatprep.subr.bf16.mxu0 0
        %1161 = vmatpush2.bf16.xpose.msra.mxu0 0
        %1162 = vmatprep.subr.bf16.mxu0 0
        %1163 = vmatpush2.bf16.xpose.msra.mxu0 0
        %1164 = vmatprep.mubr.bf16.mxu0 0
        %1165 = vmatmul.mubr.bf16.gmra.mxu0 %v1124
        %v1166 = vpop.f32.mrf.mxu0
        %v1167 = vadd.f32 %v992, %v1166
        %v1168 = vpop.f32.mrf.mxu0
        %v1169 = vpop.f32.mrf.mxu0
        %v1170 = vadd.f32 %v993, %v1169
        %v1171 = vpop.f32.mrf.mxu0
        %1172 = vdwg.mxu0
        %v1173 = vsel %vm994, %v1167, -inf
        %1174 = vmax.xlane.f32.xlu0 %v1173
        %v1175 = vpop.xlane.xlu0 %1174
        %v1176 = vsel %vm994, %v1170, -inf
        %1177 = vmax.xlane.f32.xlu0 %v1176
        %v1178 = vpop.xlane.xlu0 %1177
        %v1179 = vsub.f32 %v1167, %v1175
        %v1180 = vsub.f32 %v1170, %v1178
        %v1181 = vmul.f32 %v1179, 1.442695
        %v1182 = vpow.pop %v1181
        %v1183 = vmul.f32 %v1180, 1.442695
        %v1184 = vpow.pop %v1183
        %v1185 = vsel %vm994, %v1182, 0.0
        %1186 = vadd.xlane.f32.xlu0 %v1185
        %v1187 = vpop.xlane.xlu0 %1186
        %v1188 = vsel %vm994, %v1184, 0.0
        %1189 = vadd.xlane.f32.xlu0 %v1188
        %v1190 = vpop.xlane.xlu0 %1189
        %v1191 = vrcp.pop %v1187
        %v1192 = vmul.f32 %v1182, %v1191
        %v1193 = vrcp.pop %v1190
        %v1194 = vmul.f32 %v1184, %v1193
        %v1195 = vpack.c.bf16 %v1194, %v1192
        %1198 = vrot.lane.b32.xlu0 %v961, 96
        %v1199 = vpop.permute.xlu0 %1198
        %1200 = vrot.lane.b32.xlu0 %v962, 96
        %v1201 = vpop.permute.xlu0 %1200
        %v1205 = vsel %vm994, %v1195, 0
        %1207 = vmatprep.subr.bf16.mxu0 0
        %1208 = vmatpush1.bf16.msra.mxu0 0
        %1209 = vmatprep.subr.bf16.mxu0 0
        %1210 = vmatpush1.bf16.msra.mxu0 0
        %1211 = vmatprep.subr.bf16.mxu0 0
        %1212 = vmatpush1.bf16.msra.mxu0 0
        %1213 = vmatprep.subr.bf16.mxu0 0
        %1214 = vmatpush1.bf16.msra.mxu0 0
        %1215 = vmatprep.subr.bf16.mxu0 0
        %1216 = vmatpush1.bf16.msra.mxu0 0
        %1217 = vmatprep.subr.bf16.mxu0 0
        %1218 = vmatpush1.bf16.msra.mxu0 0
        %1219 = vmatprep.subr.bf16.mxu0 0
        %1220 = vmatpush1.bf16.msra.mxu0 %v1201
        %1221 = vmatprep.subr.bf16.mxu0 0
        %1222 = vmatpush1.bf16.msra.mxu0 %v1199
        %1223 = vmatprep.subr.bf16.mxu0 0
        %1224 = vmatpush2.bf16.msra.mxu0 0
        %1225 = vmatprep.subr.bf16.mxu0 0
        %1226 = vmatpush2.bf16.msra.mxu0 0
        %1227 = vmatprep.subr.bf16.mxu0 0
        %1228 = vmatpush2.bf16.msra.mxu0 0
        %1229 = vmatprep.subr.bf16.mxu0 0
        %1230 = vmatpush2.bf16.msra.mxu0 0
        %1231 = vmatprep.subr.bf16.mxu0 0
        %1232 = vmatpush2.bf16.msra.mxu0 0
        %1233 = vmatprep.subr.bf16.mxu0 0
        %1234 = vmatpush2.bf16.msra.mxu0 0
        %1235 = vmatprep.subr.bf16.mxu0 0
        %1236 = vmatpush2.bf16.msra.mxu0 0
        %1237 = vmatprep.subr.bf16.mxu0 0
        %1238 = vmatpush2.bf16.msra.mxu0 0
        %1239 = vmatprep.mubr.bf16.mxu0 0
        %1240 = vmatmul.mubr.bf16.gmra.mxu0 %v1205
        %v1241 = vpop.f32.mrf.mxu0
        %v1242 = vadd.f32 0.0, %v1241
        %v1243 = vpop.f32.mrf.mxu0
        %v1244 = vpop.f32.mrf.mxu0
        %v1245 = vadd.f32 0.0, %v1244
        %v1246 = vpop.f32.mrf.mxu0
        %1247 = vdwg.mxu0
        %1250 = vrot.lane.b32.xlu0 %v1242, 32
        %v1251 = vpop.permute.xlu0 %1250
        %1252 = vrot.lane.b32.xlu0 %v1245, 32
        %v1253 = vpop.permute.xlu0 %1252
        %vm1256 = vcmask 523520
        %1257 = vst.msk [vmem:[#allocation2] sm:$0xff] %vm1256, %v1251
        %1258 = vst.msk [vmem:[#allocation2 + $0x8] sm:$0xff] %vm1256, %v1253
        %1259 = vrot.lane.b32.xlu0 %v958, 64
        %v1260 = vpop.permute.xlu0 %1259
        %1261 = vrot.lane.b32.xlu0 %v959, 64
        %v1262 = vpop.permute.xlu0 %1261
        %1263 = vrot.lane.b32.xlu0 %v960, 64
        %v1264 = vpop.permute.xlu0 %1263
        %v1266 = vsel %vm994, %v1260, 0
        %v1269 = vsel %vm994, %v1262, 0
        %v1272 = vsel %vm994, %v1264, 0
        %1274 = vmatprep.subr.bf16.mxu0 0
        %1275 = vmatpush1.bf16.xpose.msra.mxu0 0
        %1276 = vmatprep.subr.bf16.mxu0 0
        %1277 = vmatpush1.bf16.xpose.msra.mxu0 0
        %1278 = vmatprep.subr.bf16.mxu0 0
        %1279 = vmatpush1.bf16.xpose.msra.mxu0 0
        %1280 = vmatprep.subr.bf16.mxu0 0
        %1281 = vmatpush1.bf16.xpose.msra.mxu0 0
        %1282 = vmatprep.subr.bf16.mxu0 0
        %1283 = vmatpush1.bf16.xpose.msra.mxu0 0
        %1284 = vmatprep.subr.bf16.mxu0 0
        %1285 = vmatpush1.bf16.xpose.msra.mxu0 0
        %1286 = vmatprep.subr.bf16.mxu0 0
        %1287 = vmatpush1.bf16.xpose.msra.mxu0 %v1272
        %1288 = vmatprep.subr.bf16.mxu0 0
        %1289 = vmatpush1.bf16.xpose.msra.mxu0 %v1269
        %1290 = vmatprep.subr.bf16.mxu0 0
        %1291 = vmatpush2.bf16.xpose.msra.mxu0 0
        %1292 = vmatprep.subr.bf16.mxu0 0
        %1293 = vmatpush2.bf16.xpose.msra.mxu0 0
        %1294 = vmatprep.subr.bf16.mxu0 0
        %1295 = vmatpush2.bf16.xpose.msra.mxu0 0
        %1296 = vmatprep.subr.bf16.mxu0 0
        %1297 = vmatpush2.bf16.xpose.msra.mxu0 0
        %1298 = vmatprep.subr.bf16.mxu0 0
        %1299 = vmatpush2.bf16.xpose.msra.mxu0 0
        %1300 = vmatprep.subr.bf16.mxu0 0
        %1301 = vmatpush2.bf16.xpose.msra.mxu0 0
        %1302 = vmatprep.subr.bf16.mxu0 0
        %1303 = vmatpush2.bf16.xpose.msra.mxu0 0
        %1304 = vmatprep.subr.bf16.mxu0 0
        %1305 = vmatpush2.bf16.xpose.msra.mxu0 0
        %1306 = vmatprep.mubr.bf16.mxu0 0
        %1307 = vmatmul.mubr.bf16.gmra.mxu0 %v1266
        %v1308 = vpop.f32.mrf.mxu0
        %v1309 = vadd.f32 %v992, %v1308
        %v1310 = vpop.f32.mrf.mxu0
        %v1311 = vpop.f32.mrf.mxu0
        %v1312 = vadd.f32 %v993, %v1311
        %v1313 = vpop.f32.mrf.mxu0
        %1314 = vdwg.mxu0
        %v1315 = vsel %vm994, %v1309, -inf
        %1316 = vmax.xlane.f32.xlu0 %v1315
        %v1317 = vpop.xlane.xlu0 %1316
        %v1318 = vsel %vm994, %v1312, -inf
        %1319 = vmax.xlane.f32.xlu0 %v1318
        %v1320 = vpop.xlane.xlu0 %1319
        %v1321 = vsub.f32 %v1309, %v1317
        %v1322 = vsub.f32 %v1312, %v1320
        %v1323 = vmul.f32 %v1321, 1.442695
        %v1324 = vpow.pop %v1323
        %v1325 = vmul.f32 %v1322, 1.442695
        %v1326 = vpow.pop %v1325
        %v1327 = vsel %vm994, %v1324, 0.0
        %1328 = vadd.xlane.f32.xlu0 %v1327
        %v1329 = vpop.xlane.xlu0 %1328
        %v1330 = vsel %vm994, %v1326, 0.0
        %1331 = vadd.xlane.f32.xlu0 %v1330
        %v1332 = vpop.xlane.xlu0 %1331
        %v1333 = vrcp.pop %v1329
        %v1334 = vmul.f32 %v1324, %v1333
        %v1335 = vrcp.pop %v1332
        %v1336 = vmul.f32 %v1326, %v1335
        %v1337 = vpack.c.bf16 %v1336, %v1334
        %1338 = vrot.lane.b32.xlu0 %v961, 64
        %v1339 = vpop.permute.xlu0 %1338
        %1340 = vrot.lane.b32.xlu0 %v962, 64
        %v1341 = vpop.permute.xlu0 %1340
        %v1345 = vsel %vm994, %v1337, 0
        %1347 = vmatprep.subr.bf16.mxu0 0
        %1348 = vmatpush1.bf16.msra.mxu0 0
        %1349 = vmatprep.subr.bf16.mxu0 0
        %1350 = vmatpush1.bf16.msra.mxu0 0
        %1351 = vmatprep.subr.bf16.mxu0 0
        %1352 = vmatpush1.bf16.msra.mxu0 0
        %1353 = vmatprep.subr.bf16.mxu0 0
        %1354 = vmatpush1.bf16.msra.mxu0 0
        %1355 = vmatprep.subr.bf16.mxu0 0
        %1356 = vmatpush1.bf16.msra.mxu0 0
        %1357 = vmatprep.subr.bf16.mxu0 0
        %1358 = vmatpush1.bf16.msra.mxu0 0
        %1359 = vmatprep.subr.bf16.mxu0 0
        %1360 = vmatpush1.bf16.msra.mxu0 %v1341
        %1361 = vmatprep.subr.bf16.mxu0 0
        %1362 = vmatpush1.bf16.msra.mxu0 %v1339
        %1363 = vmatprep.subr.bf16.mxu0 0
        %1364 = vmatpush2.bf16.msra.mxu0 0
        %1365 = vmatprep.subr.bf16.mxu0 0
        %1366 = vmatpush2.bf16.msra.mxu0 0
        %1367 = vmatprep.subr.bf16.mxu0 0
        %1368 = vmatpush2.bf16.msra.mxu0 0
        %1369 = vmatprep.subr.bf16.mxu0 0
        %1370 = vmatpush2.bf16.msra.mxu0 0
        %1371 = vmatprep.subr.bf16.mxu0 0
        %1372 = vmatpush2.bf16.msra.mxu0 0
        %1373 = vmatprep.subr.bf16.mxu0 0
        %1374 = vmatpush2.bf16.msra.mxu0 0
        %1375 = vmatprep.subr.bf16.mxu0 0
        %1376 = vmatpush2.bf16.msra.mxu0 0
        %1377 = vmatprep.subr.bf16.mxu0 0
        %1378 = vmatpush2.bf16.msra.mxu0 0
        %1379 = vmatprep.mubr.bf16.mxu0 0
        %1380 = vmatmul.mubr.bf16.gmra.mxu0 %v1345
        %v1381 = vpop.f32.mrf.mxu0
        %v1382 = vadd.f32 0.0, %v1381
        %v1383 = vpop.f32.mrf.mxu0
        %v1384 = vpop.f32.mrf.mxu0
        %v1385 = vadd.f32 0.0, %v1384
        %v1386 = vpop.f32.mrf.mxu0
        %1387 = vdwg.mxu0
        %1390 = vrot.lane.b32.xlu0 %v1382, 64
        %v1391 = vpop.permute.xlu0 %1390
        %1392 = vrot.lane.b32.xlu0 %v1385, 64
        %v1393 = vpop.permute.xlu0 %1392
        %vm1396 = vcmask 785920
        %1397 = vst.msk [vmem:[#allocation2] sm:$0xff] %vm1396, %v1391
        %1398 = vst.msk [vmem:[#allocation2 + $0x8] sm:$0xff] %vm1396, %v1393
        %1399 = vrot.lane.b32.xlu0 %v958, 32
        %v1400 = vpop.permute.xlu0 %1399
        %1401 = vrot.lane.b32.xlu0 %v959, 32
        %v1402 = vpop.permute.xlu0 %1401
        %1403 = vrot.lane.b32.xlu0 %v960, 32
        %v1404 = vpop.permute.xlu0 %1403
        %v1406 = vsel %vm994, %v1400, 0
        %v1409 = vsel %vm994, %v1402, 0
        %v1412 = vsel %vm994, %v1404, 0
        %1414 = vmatprep.subr.bf16.mxu0 0
        %1415 = vmatpush1.bf16.xpose.msra.mxu0 0
        %1416 = vmatprep.subr.bf16.mxu0 0
        %1417 = vmatpush1.bf16.xpose.msra.mxu0 0
        %1418 = vmatprep.subr.bf16.mxu0 0
        %1419 = vmatpush1.bf16.xpose.msra.mxu0 0
        %1420 = vmatprep.subr.bf16.mxu0 0
        %1421 = vmatpush1.bf16.xpose.msra.mxu0 0
        %1422 = vmatprep.subr.bf16.mxu0 0
        %1423 = vmatpush1.bf16.xpose.msra.mxu0 0
        %1424 = vmatprep.subr.bf16.mxu0 0
        %1425 = vmatpush1.bf16.xpose.msra.mxu0 0
        %1426 = vmatprep.subr.bf16.mxu0 0
        %1427 = vmatpush1.bf16.xpose.msra.mxu0 %v1412
        %1428 = vmatprep.subr.bf16.mxu0 0
        %1429 = vmatpush1.bf16.xpose.msra.mxu0 %v1409
        %1430 = vmatprep.subr.bf16.mxu0 0
        %1431 = vmatpush2.bf16.xpose.msra.mxu0 0
        %1432 = vmatprep.subr.bf16.mxu0 0
        %1433 = vmatpush2.bf16.xpose.msra.mxu0 0
        %1434 = vmatprep.subr.bf16.mxu0 0
        %1435 = vmatpush2.bf16.xpose.msra.mxu0 0
        %1436 = vmatprep.subr.bf16.mxu0 0
        %1437 = vmatpush2.bf16.xpose.msra.mxu0 0
        %1438 = vmatprep.subr.bf16.mxu0 0
        %1439 = vmatpush2.bf16.xpose.msra.mxu0 0
        %1440 = vmatprep.subr.bf16.mxu0 0
        %1441 = vmatpush2.bf16.xpose.msra.mxu0 0
        %1442 = vmatprep.subr.bf16.mxu0 0
        %1443 = vmatpush2.bf16.xpose.msra.mxu0 0
        %1444 = vmatprep.subr.bf16.mxu0 0
        %1445 = vmatpush2.bf16.xpose.msra.mxu0 0
        %1446 = vmatprep.mubr.bf16.mxu0 0
        %1447 = vmatmul.mubr.bf16.gmra.mxu0 %v1406
        %v1448 = vpop.f32.mrf.mxu0
        %v1449 = vadd.f32 %v992, %v1448
        %v1450 = vpop.f32.mrf.mxu0
        %v1451 = vpop.f32.mrf.mxu0
        %v1452 = vadd.f32 %v993, %v1451
        %v1453 = vpop.f32.mrf.mxu0
        %1454 = vdwg.mxu0
        %v1455 = vsel %vm994, %v1449, -inf
        %1456 = vmax.xlane.f32.xlu0 %v1455
        %v1457 = vpop.xlane.xlu0 %1456
        %v1458 = vsel %vm994, %v1452, -inf
        %1459 = vmax.xlane.f32.xlu0 %v1458
        %v1460 = vpop.xlane.xlu0 %1459
        %v1461 = vsub.f32 %v1449, %v1457
        %v1462 = vsub.f32 %v1452, %v1460
        %v1463 = vmul.f32 %v1461, 1.442695
        %v1464 = vpow.pop %v1463
        %v1465 = vmul.f32 %v1462, 1.442695
        %v1466 = vpow.pop %v1465
        %v1467 = vsel %vm994, %v1464, 0.0
        %1468 = vadd.xlane.f32.xlu0 %v1467
        %v1469 = vpop.xlane.xlu0 %1468
        %v1470 = vsel %vm994, %v1466, 0.0
        %1471 = vadd.xlane.f32.xlu0 %v1470
        %v1472 = vpop.xlane.xlu0 %1471
        %v1473 = vrcp.pop %v1469
        %v1474 = vmul.f32 %v1464, %v1473
        %v1475 = vrcp.pop %v1472
        %v1476 = vmul.f32 %v1466, %v1475
        %v1477 = vpack.c.bf16 %v1476, %v1474
        %1478 = vrot.lane.b32.xlu0 %v961, 32
        %v1479 = vpop.permute.xlu0 %1478
        %1480 = vrot.lane.b32.xlu0 %v962, 32
        %v1481 = vpop.permute.xlu0 %1480
        %v1485 = vsel %vm994, %v1477, 0
        %1487 = vmatprep.subr.bf16.mxu0 0
        %1488 = vmatpush1.bf16.msra.mxu0 0
        %1489 = vmatprep.subr.bf16.mxu0 0
        %1490 = vmatpush1.bf16.msra.mxu0 0
        %1491 = vmatprep.subr.bf16.mxu0 0
        %1492 = vmatpush1.bf16.msra.mxu0 0
        %1493 = vmatprep.subr.bf16.mxu0 0
        %1494 = vmatpush1.bf16.msra.mxu0 0
        %1495 = vmatprep.subr.bf16.mxu0 0
        %1496 = vmatpush1.bf16.msra.mxu0 0
        %1497 = vmatprep.subr.bf16.mxu0 0
        %1498 = vmatpush1.bf16.msra.mxu0 0
        %1499 = vmatprep.subr.bf16.mxu0 0
        %1500 = vmatpush1.bf16.msra.mxu0 %v1481
        %1501 = vmatprep.subr.bf16.mxu0 0
        %1502 = vmatpush1.bf16.msra.mxu0 %v1479
        %1503 = vmatprep.subr.bf16.mxu0 0
        %1504 = vmatpush2.bf16.msra.mxu0 0
        %1505 = vmatprep.subr.bf16.mxu0 0
        %1506 = vmatpush2.bf16.msra.mxu0 0
        %1507 = vmatprep.subr.bf16.mxu0 0
        %1508 = vmatpush2.bf16.msra.mxu0 0
        %1509 = vmatprep.subr.bf16.mxu0 0
        %1510 = vmatpush2.bf16.msra.mxu0 0
        %1511 = vmatprep.subr.bf16.mxu0 0
        %1512 = vmatpush2.bf16.msra.mxu0 0
        %1513 = vmatprep.subr.bf16.mxu0 0
        %1514 = vmatpush2.bf16.msra.mxu0 0
        %1515 = vmatprep.subr.bf16.mxu0 0
        %1516 = vmatpush2.bf16.msra.mxu0 0
        %1517 = vmatprep.subr.bf16.mxu0 0
        %1518 = vmatpush2.bf16.msra.mxu0 0
        %1519 = vmatprep.mubr.bf16.mxu0 0
        %1520 = vmatmul.mubr.bf16.gmra.mxu0 %v1485
        %v1521 = vpop.f32.mrf.mxu0
        %v1522 = vadd.f32 0.0, %v1521
        %v1523 = vpop.f32.mrf.mxu0
        %v1524 = vpop.f32.mrf.mxu0
        %v1525 = vadd.f32 0.0, %v1524
        %v1526 = vpop.f32.mrf.mxu0
        %1527 = vdwg.mxu0
        %1530 = vrot.lane.b32.xlu0 %v1522, 96
        %v1531 = vpop.permute.xlu0 %1530
        %1532 = vrot.lane.b32.xlu0 %v1525, 96
        %v1533 = vpop.permute.xlu0 %1532
        %vm1536 = vcmask 1048320
        %1537 = vst.msk [vmem:[#allocation2] sm:$0xff] %vm1536, %v1531
        %1538 = vst.msk [vmem:[#allocation2 + $0x8] sm:$0xff] %vm1536, %v1533
        %v1539 = vld [vmem:[#allocation2] sm:$0xff]
        %v1540 = vld [vmem:[#allocation2 + $0x8] sm:$0xff]
        %v1541 = vpack.c.bf16 %v1540, %v1539
        %v1542 = vld [vmem:[#allocation11] sm:$0xf]
        %v1543 = vld [vmem:[#allocation11 + $0x4] sm:$0xf]
        %v1544 = vld [vmem:[#allocation11 + $0x8] sm:$0xf]
        %v1545 = vld [vmem:[#allocation11 + $0xc] sm:$0xf]
        %v1546 = vld [vmem:[#allocation11 + $0x10] sm:$0xf]
        %v1547 = vld [vmem:[#allocation11 + $0x14] sm:$0xf]
        %v1548 = vld [vmem:[#allocation11 + $0x18] sm:$0xf]
        %v1549 = vld [vmem:[#allocation11 + $0x1c] sm:$0xf]
        %v1550 = vld [vmem:[#allocation11 + $0x20] sm:$0xf]
        %v1551 = vld [vmem:[#allocation11 + $0x24] sm:$0xf]
        %v1552 = vld [vmem:[#allocation11 + $0x28] sm:$0xf]
        %v1553 = vld [vmem:[#allocation11 + $0x2c] sm:$0xf]
        %v1554 = vld [vmem:[#allocation11 + $0x30] sm:$0xf]
        %v1555 = vld [vmem:[#allocation11 + $0x34] sm:$0xf]
        %v1556 = vld [vmem:[#allocation11 + $0x38] sm:$0xf]
        %v1557 = vld [vmem:[#allocation11 + $0x3c] sm:$0xf]
        %v1558 = vld [vmem:[%s7] sm:$0x1]
        %v1560 = vlaneseq
        %v1561 = vshrl.u32 %v1560, 7
        %v1562 = vsub.s32 0, %v1561
        %v1563 = vrot.slane %v1558, %v1562
        %v1581 = vunpack.c.l.b16 %v1542
        %v1582 = vunpack.c.l.b16 %v1543
        %v1583 = vunpack.c.l.b16 %v1544
        %v1584 = vunpack.c.l.b16 %v1545
        %v1585 = vunpack.c.l.b16 %v1546
        %v1586 = vunpack.c.l.b16 %v1547
        %v1587 = vunpack.c.l.b16 %v1548
        %v1588 = vunpack.c.l.b16 %v1549
        %v1589 = vunpack.c.l.b16 %v1550
        %v1590 = vunpack.c.l.b16 %v1551
        %v1591 = vunpack.c.l.b16 %v1552
        %v1592 = vunpack.c.l.b16 %v1553
        %v1593 = vunpack.c.l.b16 %v1554
        %v1594 = vunpack.c.l.b16 %v1555
        %v1595 = vunpack.c.l.b16 %v1556
        %v1596 = vunpack.c.l.b16 %v1557
        %v1597 = vpack.c.b16 %v1582, %v1581
        %v1598 = vpack.c.b16 %v1584, %v1583
        %v1599 = vpack.c.b16 %v1586, %v1585
        %v1600 = vpack.c.b16 %v1588, %v1587
        %v1601 = vpack.c.b16 %v1590, %v1589
        %v1602 = vpack.c.b16 %v1592, %v1591
        %v1603 = vpack.c.b16 %v1594, %v1593
        %v1604 = vpack.c.b16 %v1596, %v1595
        %1613 = vmatprep.subr.bf16.mxu0 0
        %1614 = vmatpush1.bf16.msra.mxu0 %v1604
        %1615 = vmatprep.subr.bf16.mxu0 0
        %1616 = vmatpush1.bf16.msra.mxu0 %v1603
        %1617 = vmatprep.subr.bf16.mxu0 0
        %1618 = vmatpush1.bf16.msra.mxu0 %v1602
        %1619 = vmatprep.subr.bf16.mxu0 0
        %1620 = vmatpush1.bf16.msra.mxu0 %v1601
        %1621 = vmatprep.subr.bf16.mxu0 0
        %1622 = vmatpush1.bf16.msra.mxu0 %v1600
        %1623 = vmatprep.subr.bf16.mxu0 0
        %1624 = vmatpush1.bf16.msra.mxu0 %v1599
        %1625 = vmatprep.subr.bf16.mxu0 0
        %1626 = vmatpush1.bf16.msra.mxu0 %v1598
        %1627 = vmatprep.subr.bf16.mxu0 0
        %1628 = vmatpush1.bf16.msra.mxu0 %v1597
        %1629 = vmatprep.subr.bf16.mxu0 0
        %1630 = vmatpush2.bf16.msra.mxu0 0
        %1631 = vmatprep.subr.bf16.mxu0 0
        %1632 = vmatpush2.bf16.msra.mxu0 0
        %1633 = vmatprep.subr.bf16.mxu0 0
        %1634 = vmatpush2.bf16.msra.mxu0 0
        %1635 = vmatprep.subr.bf16.mxu0 0
        %1636 = vmatpush2.bf16.msra.mxu0 0
        %1637 = vmatprep.subr.bf16.mxu0 0
        %1638 = vmatpush2.bf16.msra.mxu0 0
        %1639 = vmatprep.subr.bf16.mxu0 0
        %1640 = vmatpush2.bf16.msra.mxu0 0
        %1641 = vmatprep.subr.bf16.mxu0 0
        %1642 = vmatpush2.bf16.msra.mxu0 0
        %1643 = vmatprep.subr.bf16.mxu0 0
        %1644 = vmatpush2.bf16.msra.mxu0 0
        %1645 = vmatprep.mubr.bf16.mxu0 0
        %1646 = vmatmul.mubr.bf16.gmra.mxu0 %v1541
        %v1647 = vpop.f32.mrf.mxu0
        %v1648 = vadd.f32 %v1563, %v1647
        %v1649 = vpop.f32.mrf.mxu0
        %v1650 = vpop.f32.mrf.mxu0
        %v1651 = vadd.f32 %v1563, %v1650
        %v1652 = vpop.f32.mrf.mxu0
        %1653 = vdwg.mxu0
        %v1654 = vadd.f32 %v673, %v1648
        %v1655 = vadd.f32 %v674, %v1651
        %v1656 = vld [vmem:[%s8] sm:$0x1]
        %v1657 = vld [vmem:[%s9] sm:$0x1]
        %1658 = vadd.xlane.f32.xlu0 %v1654
        %v1659 = vpop.xlane.xlu0 %1658
        %1660 = vadd.xlane.f32.xlu0 %v1655
        %v1661 = vpop.xlane.xlu0 %1660
        %v1662 = vrcp.pop 128.0
        %v1663 = vmul.f32 %v1659, %v1662
        %v1664 = vmul.f32 %v1661, %v1662
        %v1665 = vsub.f32 %v1654, %v1663
        %v1666 = vsub.f32 %v1655, %v1664
        %v1667 = vmul.f32 %v1665, %v1665
        %v1668 = vmul.f32 %v1666, %v1666
        %1669 = vadd.xlane.f32.xlu0 %v1667
        %v1670 = vpop.xlane.xlu0 %1669
        %1671 = vadd.xlane.f32.xlu0 %v1668
        %v1672 = vpop.xlane.xlu0 %1671
        %v1673 = vmul.f32 %v1670, %v1662
        %v1674 = vmul.f32 %v1672, %v1662
        %v1675 = vadd.f32 %v1673, 1e-05
        %v1676 = vadd.f32 %v1674, 1e-05
        %v1677 = vrsqrt.pop %v1675
        %v1678 = vrsqrt.pop %v1676
        %v1679 = vmul.f32 %v1665, %v1677
        %v1680 = vmul.f32 %v1666, %v1678
        %v1682 = vlaneseq
        %v1683 = vshrl.u32 %v1682, 7
        %v1684 = vsub.s32 0, %v1683
        %v1685 = vrot.slane %v1656, %v1684
        %v1687 = vmul.f32 %v1679, %v1685
        %v1688 = vmul.f32 %v1680, %v1685
        %v1690 = vlaneseq
        %v1691 = vshrl.u32 %v1690, 7
        %v1692 = vsub.s32 0, %v1691
        %v1693 = vrot.slane %v1657, %v1692
        %v1695 = vadd.f32 %v1687, %v1693
        %v1696 = vadd.f32 %v1688, %v1693
        %v1697 = vpack.c.bf16 %v1696, %v1695
        %v1698 = vld [vmem:[#allocation12] sm:$0xff]
        %v1699 = vld [vmem:[#allocation12 + $0x8] sm:$0xff]
        %v1700 = vld [vmem:[#allocation12 + $0x10] sm:$0xff]
        %v1701 = vld [vmem:[#allocation12 + $0x18] sm:$0xff]
        %v1702 = vld [vmem:[#allocation12 + $0x20] sm:$0xff]
        %v1703 = vld [vmem:[#allocation12 + $0x28] sm:$0xff]
        %v1704 = vld [vmem:[#allocation12 + $0x30] sm:$0xff]
        %v1705 = vld [vmem:[#allocation12 + $0x38] sm:$0xff]
        %v1706 = vld [vmem:[#allocation12 + $0x40] sm:$0xff]
        %v1707 = vld [vmem:[#allocation12 + $0x48] sm:$0xff]
        %v1708 = vld [vmem:[#allocation12 + $0x50] sm:$0xff]
        %v1709 = vld [vmem:[#allocation12 + $0x58] sm:$0xff]
        %v1710 = vld [vmem:[#allocation12 + $0x60] sm:$0xff]
        %v1711 = vld [vmem:[#allocation12 + $0x68] sm:$0xff]
        %v1712 = vld [vmem:[#allocation12 + $0x70] sm:$0xff]
        %v1713 = vld [vmem:[#allocation12 + $0x78] sm:$0xff]
        %v1714 = vld [vmem:[%s11] sm:$0x3]
        %v1716 = vlaneseq
        %v1717 = vshrl.u32 %v1716, 7
        %v1718 = vsub.s32 0, %v1717
        %v1719 = vrot.slane %v1714, %v1718
        %v1720 = vlaneseq
        %v1721 = vshrl.u32 %v1720, 7
        %v1722 = vsub.s32 1, %v1721
        %v1723 = vrot.slane %v1714, %v1722
        %v1742 = vunpack.c.l.b16 %v1698
        %v1743 = vunpack.c.h.b16 %v1698
        %v1744 = vunpack.c.l.b16 %v1699
        %v1745 = vunpack.c.h.b16 %v1699
        %v1746 = vunpack.c.l.b16 %v1700
        %v1747 = vunpack.c.h.b16 %v1700
        %v1748 = vunpack.c.l.b16 %v1701
        %v1749 = vunpack.c.h.b16 %v1701
        %v1750 = vunpack.c.l.b16 %v1702
        %v1751 = vunpack.c.h.b16 %v1702
        %v1752 = vunpack.c.l.b16 %v1703
        %v1753 = vunpack.c.h.b16 %v1703
        %v1754 = vunpack.c.l.b16 %v1704
        %v1755 = vunpack.c.h.b16 %v1704
        %v1756 = vunpack.c.l.b16 %v1705
        %v1757 = vunpack.c.h.b16 %v1705
        %v1758 = vunpack.c.l.b16 %v1706
        %v1759 = vunpack.c.h.b16 %v1706
        %v1760 = vunpack.c.l.b16 %v1707
        %v1761 = vunpack.c.h.b16 %v1707
        %v1762 = vunpack.c.l.b16 %v1708
        %v1763 = vunpack.c.h.b16 %v1708
        %v1764 = vunpack.c.l.b16 %v1709
        %v1765 = vunpack.c.h.b16 %v1709
        %v1766 = vunpack.c.l.b16 %v1710
        %v1767 = vunpack.c.h.b16 %v1710
        %v1768 = vunpack.c.l.b16 %v1711
        %v1769 = vunpack.c.h.b16 %v1711
        %v1770 = vunpack.c.l.b16 %v1712
        %v1771 = vunpack.c.h.b16 %v1712
        %v1772 = vunpack.c.l.b16 %v1713
        %v1773 = vunpack.c.h.b16 %v1713
        %v1774 = vpack.c.b16 %v1744, %v1742
        %v1775 = vpack.c.b16 %v1745, %v1743
        %v1776 = vpack.c.b16 %v1748, %v1746
        %v1777 = vpack.c.b16 %v1749, %v1747
        %v1778 = vpack.c.b16 %v1752, %v1750
        %v1779 = vpack.c.b16 %v1753, %v1751
        %v1780 = vpack.c.b16 %v1756, %v1754
        %v1781 = vpack.c.b16 %v1757, %v1755
        %v1782 = vpack.c.b16 %v1760, %v1758
        %v1783 = vpack.c.b16 %v1761, %v1759
        %v1784 = vpack.c.b16 %v1764, %v1762
        %v1785 = vpack.c.b16 %v1765, %v1763
        %v1786 = vpack.c.b16 %v1768, %v1766
        %v1787 = vpack.c.b16 %v1769, %v1767
        %v1788 = vpack.c.b16 %v1772, %v1770
        %v1789 = vpack.c.b16 %v1773, %v1771
        %1806 = vmatprep.subr.bf16.mxu0 %v1789
        %1807 = vmatpush1.bf16.msra.mxu0 %v1788
        %1808 = vmatprep.subr.bf16.mxu0 %v1787
        %1809 = vmatpush1.bf16.msra.mxu0 %v1786
        %1810 = vmatprep.subr.bf16.mxu0 %v1785
        %1811 = vmatpush1.bf16.msra.mxu0 %v1784
        %1812 = vmatprep.subr.bf16.mxu0 %v1783
        %1813 = vmatpush1.bf16.msra.mxu0 %v1782
        %1814 = vmatprep.subr.bf16.mxu0 %v1781
        %1815 = vmatpush1.bf16.msra.mxu0 %v1780
        %1816 = vmatprep.subr.bf16.mxu0 %v1779
        %1817 = vmatpush1.bf16.msra.mxu0 %v1778
        %1818 = vmatprep.subr.bf16.mxu0 %v1777
        %1819 = vmatpush1.bf16.msra.mxu0 %v1776
        %1820 = vmatprep.subr.bf16.mxu0 %v1775
        %1821 = vmatpush1.bf16.msra.mxu0 %v1774
        %1822 = vmatprep.subr.bf16.mxu0 0
        %1823 = vmatpush2.bf16.msra.mxu0 0
        %1824 = vmatprep.subr.bf16.mxu0 0
        %1825 = vmatpush2.bf16.msra.mxu0 0
        %1826 = vmatprep.subr.bf16.mxu0 0
        %1827 = vmatpush2.bf16.msra.mxu0 0
        %1828 = vmatprep.subr.bf16.mxu0 0
        %1829 = vmatpush2.bf16.msra.mxu0 0
        %1830 = vmatprep.subr.bf16.mxu0 0
        %1831 = vmatpush2.bf16.msra.mxu0 0
        %1832 = vmatprep.subr.bf16.mxu0 0
        %1833 = vmatpush2.bf16.msra.mxu0 0
        %1834 = vmatprep.subr.bf16.mxu0 0
        %1835 = vmatpush2.bf16.msra.mxu0 0
        %1836 = vmatprep.subr.bf16.mxu0 0
        %1837 = vmatpush2.bf16.msra.mxu0 0
        %1838 = vmatprep.mubr.bf16.mxu0 0
        %1839 = vmatmul.mubr.bf16.gmra.mxu0 %v1697
        %v1840 = vpop.f32.mrf.mxu0
        %v1841 = vadd.f32 %v1719, %v1840
        %v1842 = vpop.f32.mrf.mxu0
        %v1843 = vadd.f32 %v1723, %v1842
        %v1844 = vpop.f32.mrf.mxu0
        %v1845 = vadd.f32 %v1719, %v1844
        %v1846 = vpop.f32.mrf.mxu0
        %v1847 = vadd.f32 %v1723, %v1846
        %1848 = vdwg.mxu0
        %v1849 = vmul.f32 %v1841, 0.5
        %v1850 = vmul.f32 %v1843, 0.5
        %v1851 = vmul.f32 %v1845, 0.5
        %v1852 = vmul.f32 %v1847, 0.5
        %v1853 = vmul.f32 %v1841, 0.70710677
        %v1854 = vmul.f32 %v1843, 0.70710677
        %v1855 = vmul.f32 %v1845, 0.70710677
        %v1856 = vmul.f32 %v1847, 0.70710677
        %v1857 = verf.f32.pop %v1853
        %v1858 = verf.f32.pop %v1854
        %v1859 = verf.f32.pop %v1855
        %v1860 = verf.f32.pop %v1856
        %v1861 = vadd.f32 %v1857, 1.0
        %v1862 = vadd.f32 %v1858, 1.0
        %v1863 = vadd.f32 %v1859, 1.0
        %v1864 = vadd.f32 %v1860, 1.0
        %v1865 = vmul.f32 %v1849, %v1861
        %v1866 = vmul.f32 %v1850, %v1862
        %v1867 = vmul.f32 %v1851, %v1863
        %v1868 = vmul.f32 %v1852, %v1864
        %v1869 = vpack.c.bf16 %v1867, %v1865
        %v1870 = vpack.c.bf16 %v1868, %v1866
        %v1871 = vld [vmem:[#allocation14] sm:$0xf]
        %v1872 = vld [vmem:[#allocation14 + $0x4] sm:$0xf]
        %v1873 = vld [vmem:[#allocation14 + $0x8] sm:$0xf]
        %v1874 = vld [vmem:[#allocation14 + $0xc] sm:$0xf]
        %v1875 = vld [vmem:[#allocation14 + $0x10] sm:$0xf]
        %v1876 = vld [vmem:[#allocation14 + $0x14] sm:$0xf]
        %v1877 = vld [vmem:[#allocation14 + $0x18] sm:$0xf]
        %v1878 = vld [vmem:[#allocation14 + $0x1c] sm:$0xf]
        %v1879 = vld [vmem:[#allocation14 + $0x20] sm:$0xf]
        %v1880 = vld [vmem:[#allocation14 + $0x24] sm:$0xf]
        %v1881 = vld [vmem:[#allocation14 + $0x28] sm:$0xf]
        %v1882 = vld [vmem:[#allocation14 + $0x2c] sm:$0xf]
        %v1883 = vld [vmem:[#allocation14 + $0x30] sm:$0xf]
        %v1884 = vld [vmem:[#allocation14 + $0x34] sm:$0xf]
        %v1885 = vld [vmem:[#allocation14 + $0x38] sm:$0xf]
        %v1886 = vld [vmem:[#allocation14 + $0x3c] sm:$0xf]
        %v1887 = vld [vmem:[#allocation14 + $0x40] sm:$0xf]
        %v1888 = vld [vmem:[#allocation14 + $0x44] sm:$0xf]
        %v1889 = vld [vmem:[#allocation14 + $0x48] sm:$0xf]
        %v1890 = vld [vmem:[#allocation14 + $0x4c] sm:$0xf]
        %v1891 = vld [vmem:[#allocation14 + $0x50] sm:$0xf]
        %v1892 = vld [vmem:[#allocation14 + $0x54] sm:$0xf]
        %v1893 = vld [vmem:[#allocation14 + $0x58] sm:$0xf]
        %v1894 = vld [vmem:[#allocation14 + $0x5c] sm:$0xf]
        %v1895 = vld [vmem:[#allocation14 + $0x60] sm:$0xf]
        %v1896 = vld [vmem:[#allocation14 + $0x64] sm:$0xf]
        %v1897 = vld [vmem:[#allocation14 + $0x68] sm:$0xf]
        %v1898 = vld [vmem:[#allocation14 + $0x6c] sm:$0xf]
        %v1899 = vld [vmem:[#allocation14 + $0x70] sm:$0xf]
        %v1900 = vld [vmem:[#allocation14 + $0x74] sm:$0xf]
        %v1901 = vld [vmem:[#allocation14 + $0x78] sm:$0xf]
        %v1902 = vld [vmem:[#allocation14 + $0x7c] sm:$0xf]
        %v1903 = vld [vmem:[%s13] sm:$0x1]
        %v1905 = vlaneseq
        %v1906 = vshrl.u32 %v1905, 7
        %v1907 = vsub.s32 0, %v1906
        %v1908 = vrot.slane %v1903, %v1907
        %v1942 = vunpack.c.l.b16 %v1871
        %v1943 = vunpack.c.l.b16 %v1872
        %v1944 = vunpack.c.l.b16 %v1873
        %v1945 = vunpack.c.l.b16 %v1874
        %v1946 = vunpack.c.l.b16 %v1875
        %v1947 = vunpack.c.l.b16 %v1876
        %v1948 = vunpack.c.l.b16 %v1877
        %v1949 = vunpack.c.l.b16 %v1878
        %v1950 = vunpack.c.l.b16 %v1879
        %v1951 = vunpack.c.l.b16 %v1880
        %v1952 = vunpack.c.l.b16 %v1881
        %v1953 = vunpack.c.l.b16 %v1882
        %v1954 = vunpack.c.l.b16 %v1883
        %v1955 = vunpack.c.l.b16 %v1884
        %v1956 = vunpack.c.l.b16 %v1885
        %v1957 = vunpack.c.l.b16 %v1886
        %v1958 = vunpack.c.l.b16 %v1887
        %v1959 = vunpack.c.l.b16 %v1888
        %v1960 = vunpack.c.l.b16 %v1889
        %v1961 = vunpack.c.l.b16 %v1890
        %v1962 = vunpack.c.l.b16 %v1891
        %v1963 = vunpack.c.l.b16 %v1892
        %v1964 = vunpack.c.l.b16 %v1893
        %v1965 = vunpack.c.l.b16 %v1894
        %v1966 = vunpack.c.l.b16 %v1895
        %v1967 = vunpack.c.l.b16 %v1896
        %v1968 = vunpack.c.l.b16 %v1897
        %v1969 = vunpack.c.l.b16 %v1898
        %v1970 = vunpack.c.l.b16 %v1899
        %v1971 = vunpack.c.l.b16 %v1900
        %v1972 = vunpack.c.l.b16 %v1901
        %v1973 = vunpack.c.l.b16 %v1902
        %v1974 = vpack.c.b16 %v1943, %v1942
        %v1975 = vpack.c.b16 %v1945, %v1944
        %v1976 = vpack.c.b16 %v1947, %v1946
        %v1977 = vpack.c.b16 %v1949, %v1948
        %v1978 = vpack.c.b16 %v1951, %v1950
        %v1979 = vpack.c.b16 %v1953, %v1952
        %v1980 = vpack.c.b16 %v1955, %v1954
        %v1981 = vpack.c.b16 %v1957, %v1956
        %v1982 = vpack.c.b16 %v1959, %v1958
        %v1983 = vpack.c.b16 %v1961, %v1960
        %v1984 = vpack.c.b16 %v1963, %v1962
        %v1985 = vpack.c.b16 %v1965, %v1964
        %v1986 = vpack.c.b16 %v1967, %v1966
        %v1987 = vpack.c.b16 %v1969, %v1968
        %v1988 = vpack.c.b16 %v1971, %v1970
        %v1989 = vpack.c.b16 %v1973, %v1972
        %2006 = vmatprep.subr.bf16.mxu0 0
        %2007 = vmatpush1.bf16.msra.mxu0 %v1981
        %2008 = vmatprep.subr.bf16.mxu0 0
        %2009 = vmatpush1.bf16.msra.mxu0 %v1980
        %2010 = vmatprep.subr.bf16.mxu0 0
        %2011 = vmatpush1.bf16.msra.mxu0 %v1979
        %2012 = vmatprep.subr.bf16.mxu0 0
        %2013 = vmatpush1.bf16.msra.mxu0 %v1978
        %2014 = vmatprep.subr.bf16.mxu0 0
        %2015 = vmatpush1.bf16.msra.mxu0 %v1977
        %2016 = vmatprep.subr.bf16.mxu0 0
        %2017 = vmatpush1.bf16.msra.mxu0 %v1976
        %2018 = vmatprep.subr.bf16.mxu0 0
        %2019 = vmatpush1.bf16.msra.mxu0 %v1975
        %2020 = vmatprep.subr.bf16.mxu0 0
        %2021 = vmatpush1.bf16.msra.mxu0 %v1974
        %2022 = vmatprep.subr.bf16.mxu0 0
        %2023 = vmatpush2.bf16.msra.mxu0 %v1989
        %2024 = vmatprep.subr.bf16.mxu0 0
        %2025 = vmatpush2.bf16.msra.mxu0 %v1988
        %2026 = vmatprep.subr.bf16.mxu0 0
        %2027 = vmatpush2.bf16.msra.mxu0 %v1987
        %2028 = vmatprep.subr.bf16.mxu0 0
        %2029 = vmatpush2.bf16.msra.mxu0 %v1986
        %2030 = vmatprep.subr.bf16.mxu0 0
        %2031 = vmatpush2.bf16.msra.mxu0 %v1985
        %2032 = vmatprep.subr.bf16.mxu0 0
        %2033 = vmatpush2.bf16.msra.mxu0 %v1984
        %2034 = vmatprep.subr.bf16.mxu0 0
        %2035 = vmatpush2.bf16.msra.mxu0 %v1983
        %2036 = vmatprep.subr.bf16.mxu0 0
        %2037 = vmatpush2.bf16.msra.mxu0 %v1982
        %2038 = vmatprep.mubr.bf16.mxu0 %v1870
        %2039 = vmatmul.mubr.bf16.gmra.mxu0 %v1869
        %v2040 = vpop.f32.mrf.mxu0
        %v2041 = vadd.f32 %v1908, %v2040
        %v2042 = vpop.f32.mrf.mxu0
        %v2043 = vpop.f32.mrf.mxu0
        %v2044 = vadd.f32 %v1908, %v2043
        %v2045 = vpop.f32.mrf.mxu0
        %2046 = vdwg.mxu0
        %v2047 = vadd.f32 %v1695, %v2041
        %v2048 = vadd.f32 %v1696, %v2044
        %v2049 = vld [vmem:[%s14] sm:$0x1]
        %v2050 = vld [vmem:[%s15] sm:$0x1]
        %2051 = vadd.xlane.f32.xlu0 %v2047
        %v2052 = vpop.xlane.xlu0 %2051
        %2053 = vadd.xlane.f32.xlu0 %v2048
        %v2054 = vpop.xlane.xlu0 %2053
        %v2055 = vmul.f32 %v2052, %v1662
        %v2056 = vmul.f32 %v2054, %v1662
        %v2057 = vsub.f32 %v2047, %v2055
        %v2058 = vsub.f32 %v2048, %v2056
        %v2059 = vmul.f32 %v2057, %v2057
        %v2060 = vmul.f32 %v2058, %v2058
        %2061 = vadd.xlane.f32.xlu0 %v2059
        %v2062 = vpop.xlane.xlu0 %2061
        %2063 = vadd.xlane.f32.xlu0 %v2060
        %v2064 = vpop.xlane.xlu0 %2063
        %v2065 = vmul.f32 %v2062, %v1662
        %v2066 = vmul.f32 %v2064, %v1662
        %v2067 = vadd.f32 %v2065, 1e-05
        %v2068 = vadd.f32 %v2066, 1e-05
        %v2069 = vrsqrt.pop %v2067
        %v2070 = vrsqrt.pop %v2068
        %v2071 = vmul.f32 %v2057, %v2069
        %v2072 = vmul.f32 %v2058, %v2070
        %v2074 = vlaneseq
        %v2075 = vshrl.u32 %v2074, 7
        %v2076 = vsub.s32 0, %v2075
        %v2077 = vrot.slane %v2049, %v2076
        %v2079 = vmul.f32 %v2071, %v2077
        %v2080 = vmul.f32 %v2072, %v2077
        %v2082 = vlaneseq
        %v2083 = vshrl.u32 %v2082, 7
        %v2084 = vsub.s32 0, %v2083
        %v2085 = vrot.slane %v2050, %v2084
        %v2087 = vadd.f32 %v2079, %v2085
        %v2088 = vadd.f32 %v2080, %v2085
        %2089 = vst [vmem:[%s663] sm:$0xff] %v2087
        %2090 = vst [vmem:[%s663 + $0x8] sm:$0xff] %v2088
        %s2091 = sand.u32 %s408, 1
        %s2092 = scalar_lea.sflag [#allocation5], %s2091
        %s2093 = sand.u32 %s408, 1
        %s2094 = smul.addr %s2093, 16
        %s2095 = scalar_lea.vmem [#allocation15], %s2094
        // Predicated region
        $region113: #{tpu_custom_call.1} parent=83 // pred_check
          %p2096 = pneg %p418
        $region114: #{tpu_custom_call.1} parent=83 // pred_check_branch
          %2098 = sbr.rel (%p2096) target = $region116
        $region115: #{tpu_custom_call.1} parent=83 // pred_region
          %s2099 = smul.u32 2, %s43
          %s2101 = ssub.s32 256, 256
          %2102 = vsyncadd %s2092, %s2101
          %s2103 = smul.addr %s42, 8
          %s2104 = sadd.s32 %s2099, %s2103
          %s2105 = smul.addr %s2104, 128
          %s2106 = scalar_lea.hbm %s16, %s2105
          %s2107 = sshll.u32 %s2095, 4
          %s2108 = int_to_ptr.vmem [resolvable:$true] %s2107
          %2113 = dma.vmem_to_hbm [thread:$0]  %s2108, 256, %s2106, %s2092, 128, 128, 8
        $region116: #{tpu_custom_call.1} parent=83 // pred_fallthru
          _
      $region84: #{tpu_custom_call.1} parent=5 // pred_fallthru
        _
      %p2114 = scmp.le.s32.totalorder 2, %s33
      // Predicated region
      $region117: #{tpu_custom_call.1} parent=5 // pred_check
        %p2115 = pneg %p2114
      $region118: #{tpu_custom_call.1} parent=5 // pred_check_branch
        %2117 = sbr.rel (%p2115) target = $region120
      $region119: #{tpu_custom_call.1} parent=5 // pred_region
        %s2118 = ssub.s32 %s33, 2
        // Predicated region
        $region121: #{tpu_custom_call.1} parent=119 // pred_check
          %p2119 = pneg %p424
        $region122: #{tpu_custom_call.1} parent=119 // pred_check_branch
          %2121 = sbr.rel (%p2119) target = $region124
        $region123: #{tpu_custom_call.1} parent=119 // pred_region
          %s2122 = sand.u32 %s409, 1
          %s2123 = scalar_lea.sflag [#allocation5], %s2122
          %s2124 = sand.u32 %s409, 1
          %s2125 = smul.addr %s2124, 16
          %s2126 = scalar_lea.vmem [#allocation15], %s2125
          %2127 = dma.done %s2123, 256
        $region124: #{tpu_custom_call.1} parent=119 // pred_fallthru
          _
      $region120: #{tpu_custom_call.1} parent=5 // pred_fallthru
        _
    $region6: #{tpu_custom_call.1} parent=1 // loop_footer
      %s37 = sadd.s32 1, %s33
    $region7: #{tpu_custom_call.1} parent=1 // loop_footer_branch
      %32 = sbr.rel target = $region3
    $region8: #{tpu_custom_call.1} parent=1 // loop_exit
      _
    %2128 = vsyncpa [#allocation4], 1
    %s2129 = scalar_lea.sflag [#allocation4], 1
    %2130 = vsyncpa %s2129, 1
    %2131 = vsyncpa [#allocation7], 1
    %s2132 = scalar_lea.sflag [#allocation7], 1
    %2133 = vsyncpa %s2132, 1
    %2134 = vsyncpa [#allocation10], 1
    %2135 = vsyncpa [#allocation13], 1
    %2136 = vsyncpa [#allocation5], 1
    %s2137 = scalar_lea.sflag [#allocation5], 1
    %2138 = vsyncpa %s2137, 1

</llo_original>
